<compile_context>
chip_gen: v7x
topology: tpu7x:2x2x1
jax: 0.10.0
libtpu: 0.0.40
codegen_flags: <defaults>
</compile_context>

<pallas_src>
import functools

import jax
import jax.numpy as jnp
from jax.experimental import pallas as pl
from jax.experimental.pallas import tpu as pltpu

AUGMENT = 10


# ----------------------------- in-kernel math --------------------------------

def _softplus(x):
    # numerically stable softplus == torch.nn.functional.softplus
    return jnp.maximum(x, 0.0) + jnp.log(1.0 + jnp.exp(-jnp.abs(x)))


def _sample_gamma(shp, scale, zn, log_u):
    """Mirrors GNBNTM.sample_gamma (forward values).

    Gamma(shape+10, 1) via the Marsaglia-Tsang transform of a normal WITHOUT
    the rejection step (a >= 10 => acceptance > 99.5%).
    TODO(synk): exact Gamma sampling would need a per-element rejection loop.

    Perf: the torch eps/z recompute is an algebraic identity (z == sample), so
    it is dropped; the 10-factor uniform product is computed as
    exp(sum_k log(u_k) / (shape + k - 1 + 1e-12)).
    """
    a = shp + float(AUGMENT)
    d = a - 1.0 / 3.0
    c = jnp.sqrt(9.0 * a - 3.0)
    v = 1.0 + zn / c
    z = jnp.maximum(d * v * v * v, 1e-6)          # ~ Gamma(shape + 10, 1)

    log_acc = jnp.zeros_like(shp)
    for k in range(AUGMENT):                      # unrolled at trace time
        log_acc = log_acc + log_u[k] / (shp + (float(k) + 1e-12))
    return z * jnp.exp(log_acc) * scale


def _sample_poisson(lam, zn):
    """Mirrors GNBNTM.sample_poisson (forward values).

    TODO(synk): exact Poisson sampling (per-element inversion/rejection) has no
    clean Pallas equivalent; uses the rounded normal approximation N(lam, lam).
    The torch eps/z reparameterisation reduces to the sample itself in the
    forward pass, so it is returned directly.
    """
    lam = jnp.maximum(lam, 0.0)
    return jnp.maximum(jnp.floor(lam + jnp.sqrt(lam + 1e-12) * zn + 0.5), 0.0)


# --------------------------------- kernel ------------------------------------

def _gnbntm_kernel(x_ref, wh_ref, bh_ref, wproj_ref, bproj_ref, wo_ref, bo_ref,
                   zn_ref, lu1_ref, lu2_ref,
                   slab_ref, out_ref, *, topic_num):
    T = topic_num
    bf16 = jnp.bfloat16
    f32 = jnp.float32

    x = x_ref[...]                                                      # [b, V]
    doc = jnp.tanh(
        jnp.dot(x.astype(bf16), wh_ref[...].astype(bf16),
                preferred_element_type=f32) + bh_ref[...])              # [b, H]

    # Fused gamma/scale/pj projection: one lane-dense matmul, then slice.
    proj = _softplus(
        jnp.dot(doc.astype(bf16), wproj_ref[...].astype(bf16),
                preferred_element_type=f32) + bproj_ref[...])           # [b, P]
    gamma = proj[:, :T]                                                 # [b, T]
    scale = proj[:, T:2 * T]                                            # [b, T]
    pj = proj[:, 2 * T:2 * T + 1]                                       # [b, 1]

    alpha = _sample_gamma(gamma, scale, zn_ref[0], lu1_ref[...])        # [b, T]
    lam = _sample_gamma(alpha, pj, zn_ref[1], lu2_ref[...])             # [b, T]
    n = _sample_poisson(lam, zn_ref[2])                                 # [b, T]

    sig = 1.0 / (1.0 + jnp.exp(-(n + alpha)))
    out = (jnp.dot(sig.astype(bf16), wo_ref[...].astype(bf16),
                   preferred_element_type=f32) + bo_ref[...])           # [b, V]

    # Pack gamma|scale|lam (+ zero pad) into one lane-dense slab store.
    pad = slab_ref.shape[1] - 3 * T
    pieces = [gamma, scale, lam]
    if pad:
        pieces.append(jnp.zeros((gamma.shape[0], pad), f32))
    slab_ref[...] = jnp.concatenate(pieces, axis=-1)
    out_ref[...] = out


# -------------------------------- wrapper -------------------------------------

def _round_up(n, m):
    return ((n + m - 1) // m) * m


def gnbntm_forward(x, params, key, *, block_b=None):
    B, V = x.shape
    H = params["wh"].shape[1]
    T = params["wg"].shape[1]

    if block_b is None:
        block_b = min(B, 256)
    if B % block_b != 0:
        block_b = B
    grid = (B // block_b,)

    # --- fuse gamma_fc / scale_fc / pj_fc into one [H, P] weight (P lane-dense)
    P = _round_up(2 * T + 1, 128)
    w_proj = jnp.zeros((H, P), jnp.float32)
    w_proj = w_proj.at[:, :T].set(params["wg"])
    w_proj = w_proj.at[:, T:2 * T].set(params["ws"])
    w_proj = w_proj.at[:, 2 * T].set(params["wp"][:, 0])
    b_proj = jnp.zeros((1, P), jnp.float32)
    b_proj = b_proj.at[:, :T].set(params["bg"])
    b_proj = b_proj.at[:, T:2 * T].set(params["bs"])
    b_proj = b_proj.at[:, 2 * T].set(params["bp"][0, 0])

    SLAB = _round_up(3 * T, 128)

    # --- random draws precomputed (portable; distinct per batch tile via specs)
    kz, ku1, ku2 = jax.random.split(key, 3)
    zn = jax.random.normal(kz, (3, B, T), jnp.float32)
    lu1 = jnp.log(jax.random.uniform(ku1, (AUGMENT, B, T), jnp.float32,
                                     minval=1e-7, maxval=1.0))
    lu2 = jnp.log(jax.random.uniform(ku2, (AUGMENT, B, T), jnp.float32,
                                     minval=1e-7, maxval=1.0))

    bcast2 = lambda i: (0, 0)
    in_specs = [
        pl.BlockSpec((block_b, V), lambda i: (i, 0)),            # x
        pl.BlockSpec((V, H), bcast2),                            # wh
        pl.BlockSpec((1, H), bcast2),                            # bh
        pl.BlockSpec((H, P), bcast2),                            # w_proj
        pl.BlockSpec((1, P), bcast2),                            # b_proj
        pl.BlockSpec((T, V), bcast2),                            # wo
        pl.BlockSpec((1, V), bcast2),                            # bo
        pl.BlockSpec((3, block_b, T), lambda i: (0, i, 0)),      # zn
        pl.BlockSpec((AUGMENT, block_b, T), lambda i: (0, i, 0)),  # lu1
        pl.BlockSpec((AUGMENT, block_b, T), lambda i: (0, i, 0)),  # lu2
    ]
    out_specs = (
        pl.BlockSpec((block_b, SLAB), lambda i: (i, 0)),         # gamma|scale|lam
        pl.BlockSpec((block_b, V), lambda i: (i, 0)),            # out
    )
    out_shape = (
        jax.ShapeDtypeStruct((B, SLAB), jnp.float32),
        jax.ShapeDtypeStruct((B, V), jnp.float32),
    )

    # --- VMEM budget: resident weights + double-buffered per-tile blocks
    def nbytes(shape):
        sz = 4
        for s in shape:
            sz *= s
        return sz
    resident = (nbytes((V, H)) + nbytes((1, H)) + nbytes((H, P)) + nbytes((1, P))
                + nbytes((T, V)) + nbytes((1, V)))
    per_tile = (nbytes((block_b, V)) * 2 + nbytes((3, block_b, T))
                + 2 * nbytes((AUGMENT, block_b, T)) + nbytes((block_b, SLAB)))
    vmem_bytes = 2 * (resident + per_tile) + (4 << 20)
    vmem_bytes = int(min(max(vmem_bytes, 16 << 20), 100 << 20))

    kernel = functools.partial(_gnbntm_kernel, topic_num=T)

    slab, out = pl.pallas_call(
        kernel,
        grid=grid,
        in_specs=in_specs,
        out_specs=out_specs,
        out_shape=out_shape,
        compiler_params=pltpu.CompilerParams(
            dimension_semantics=("parallel",),
            vmem_limit_bytes=vmem_bytes),
    )(x, params["wh"], params["bh"], w_proj, b_proj,
      params["wo"], params["bo"], zn, lu1, lu2)

    gamma = slab[:, :T]
    scale = slab[:, T:2 * T]
    lam = slab[:, 2 * T:3 * T]
    return gamma, scale, lam, out


# ----------------------------- parameter init ---------------------------------

def init_params(key, vocab_num, hidden_num, topic_num):
    """torch.nn.Linear-style init: U(-1/sqrt(fan_in), +1/sqrt(fan_in))."""
    ks = jax.random.split(key, 10)

    def lin(kw, kb, fan_in, shape_w, shape_b):
        bound = 1.0 / jnp.sqrt(float(fan_in))
        w = jax.random.uniform(kw, shape_w, jnp.float32, -bound, bound)
        b = jax.random.uniform(kb, shape_b, jnp.float32, -bound, bound)
        return w, b

    wh, bh = lin(ks[0], ks[1], vocab_num, (vocab_num, hidden_num), (1, hidden_num))
    wg, bg = lin(ks[2], ks[3], hidden_num, (hidden_num, topic_num), (1, topic_num))
    ws, bs = lin(ks[4], ks[5], hidden_num, (hidden_num, topic_num), (1, topic_num))
    wp, bp = lin(ks[6], ks[7], hidden_num, (hidden_num, 1), (1, 1))
    wo, bo = lin(ks[8], ks[9], topic_num, (topic_num, vocab_num), (1, vocab_num))

    return dict(wh=wh, bh=bh, wg=wg, bg=bg, ws=ws, bs=bs,
                wp=wp, bp=bp, wo=wo, bo=bo)


# ---------------------------------- main ---------------------------------------

if __name__ == "__main__":
    B, VOCAB, HIDDEN, TOPIC = 16, 128, 64, 32

    key = jax.random.PRNGKey(0)
    kparam, kx, ksample = jax.random.split(key, 3)

    params = init_params(kparam, VOCAB, HIDDEN, TOPIC)
    # bag-of-words style non-negative input batch
    x = jax.random.uniform(kx, (B, VOCAB), jnp.float32, minval=0.0, maxval=3.0)

    gamma, scale, lam, out = gnbntm_forward(x, params, ksample, block_b=8)
    jax.block_until_ready((gamma, scale, lam, out))

    assert gamma.shape == (B, TOPIC)
    assert scale.shape == (B, TOPIC)
    assert lam.shape == (B, TOPIC)
    assert out.shape == (B, VOCAB)
    assert bool(jnp.all(jnp.isfinite(gamma)))
    assert bool(jnp.all(jnp.isfinite(scale)))
    assert bool(jnp.all(jnp.isfinite(lam)))
    assert bool(jnp.all(jnp.isfinite(out)))

    print("KERNEL_OK")
</pallas_src>

<mosaic_0001>
module attributes {stable_mosaic.version = 11 : i64} {
  func.func @_gnbntm_kernel(%arg0: i32, %arg1: memref<8x128xf32, #tpu.memory_space<vmem>>, %arg2: memref<128x64xf32, #tpu.memory_space<vmem>>, %arg3: memref<1x64xf32, #tpu.memory_space<vmem>>, %arg4: memref<64x128xf32, #tpu.memory_space<vmem>>, %arg5: memref<1x128xf32, #tpu.memory_space<vmem>>, %arg6: memref<32x128xf32, #tpu.memory_space<vmem>>, %arg7: memref<1x128xf32, #tpu.memory_space<vmem>>, %arg8: memref<3x8x32xf32, #tpu.memory_space<vmem>>, %arg9: memref<10x8x32xf32, #tpu.memory_space<vmem>>, %arg10: memref<10x8x32xf32, #tpu.memory_space<vmem>>, %arg11: memref<8x128xf32, #tpu.memory_space<vmem>>, %arg12: memref<8x128xf32, #tpu.memory_space<vmem>>) attributes {dimension_semantics = [#tpu.dimension_semantics<parallel>], iteration_bounds = array<i64: 2>, scalar_prefetch = 0 : i64, scratch_operands = 0 : i64, tpu.core_type = #tpu.core_type<tc>, window_params = [{transform_indices = @transform_0, window_bounds = array<i64: 8, 128>}, {pipeline_mode = #tpu.pipeline_mode<synchronous>, transform_indices = @transform_1, window_bounds = array<i64: 128, 64>}, {pipeline_mode = #tpu.pipeline_mode<synchronous>, transform_indices = @transform_2, window_bounds = array<i64: 1, 64>}, {pipeline_mode = #tpu.pipeline_mode<synchronous>, transform_indices = @transform_3, window_bounds = array<i64: 64, 128>}, {pipeline_mode = #tpu.pipeline_mode<synchronous>, transform_indices = @transform_4, window_bounds = array<i64: 1, 128>}, {pipeline_mode = #tpu.pipeline_mode<synchronous>, transform_indices = @transform_5, window_bounds = array<i64: 32, 128>}, {pipeline_mode = #tpu.pipeline_mode<synchronous>, transform_indices = @transform_6, window_bounds = array<i64: 1, 128>}, {transform_indices = @transform_7, window_bounds = array<i64: 3, 8, 32>}, {transform_indices = @transform_8, window_bounds = array<i64: 10, 8, 32>}, {transform_indices = @transform_9, window_bounds = array<i64: 10, 8, 32>}, {transform_indices = @transform_10, window_bounds = array<i64: 8, 128>}, {transform_indices = @transform_11, window_bounds = array<i64: 8, 128>}]} {
    %c0 = arith.constant 0 : index
    %c0_0 = arith.constant 0 : index
    %0 = vector.load %arg1[%c0, %c0_0] : memref<8x128xf32, #tpu.memory_space<vmem>>, vector<8x128xf32>
    %1 = arith.truncf %0 : vector<8x128xf32> to vector<8x128xbf16>
    %c0_1 = arith.constant 0 : index
    %c0_2 = arith.constant 0 : index
    %2 = vector.load %arg2[%c0_1, %c0_2] : memref<128x64xf32, #tpu.memory_space<vmem>>, vector<128x64xf32>
    %3 = arith.truncf %2 : vector<128x64xf32> to vector<128x64xbf16>
    %cst = arith.constant dense<0.000000e+00> : vector<8x64xf32>
    %4 = tpu.matmul %1, %3, %cst {dimension_numbers = #tpu.dot_dimension_numbers<[1], [0], [0], [1], [0, 0, 1, 1], [], []>} : vector<8x128xbf16>, vector<128x64xbf16>, vector<8x64xf32> -> vector<8x64xf32>
    %c0_3 = arith.constant 0 : index
    %c0_4 = arith.constant 0 : index
    %5 = vector.load %arg3[%c0_3, %c0_4] : memref<1x64xf32, #tpu.memory_space<vmem>>, vector<1x64xf32>
    %6 = vector.broadcast %5 : vector<1x64xf32> to vector<8x64xf32>
    %7 = arith.addf %4, %6 : vector<8x64xf32>
    %8 = math.tanh %7 : vector<8x64xf32>
    %9 = arith.truncf %8 : vector<8x64xf32> to vector<8x64xbf16>
    %c0_5 = arith.constant 0 : index
    %c0_6 = arith.constant 0 : index
    %10 = vector.load %arg4[%c0_5, %c0_6] : memref<64x128xf32, #tpu.memory_space<vmem>>, vector<64x128xf32>
    %11 = arith.truncf %10 : vector<64x128xf32> to vector<64x128xbf16>
    %cst_7 = arith.constant dense<0.000000e+00> : vector<8x128xf32>
    %12 = tpu.matmul %9, %11, %cst_7 {dimension_numbers = #tpu.dot_dimension_numbers<[1], [0], [0], [1], [0, 0, 1, 1], [], []>} : vector<8x64xbf16>, vector<64x128xbf16>, vector<8x128xf32> -> vector<8x128xf32>
    %c0_8 = arith.constant 0 : index
    %c0_9 = arith.constant 0 : index
    %13 = vector.load %arg5[%c0_8, %c0_9] : memref<1x128xf32, #tpu.memory_space<vmem>>, vector<1x128xf32>
    %14 = vector.broadcast %13 : vector<1x128xf32> to vector<8x128xf32>
    %15 = arith.addf %12, %14 : vector<8x128xf32>
    %cst_10 = arith.constant 0.000000e+00 : f32
    %16 = vector.broadcast %cst_10 : f32 to vector<8x128xf32>
    %17 = arith.maximumf %15, %16 : vector<8x128xf32>
    %18 = math.absf %15 : vector<8x128xf32>
    %cst_11 = arith.constant 0.000000e+00 : f32
    %19 = vector.broadcast %cst_11 : f32 to vector<8x128xf32>
    %20 = arith.subf %19, %18 : vector<8x128xf32>
    %21 = math.exp %20 : vector<8x128xf32>
    %cst_12 = arith.constant 1.000000e+00 : f32
    %22 = vector.broadcast %cst_12 : f32 to vector<8x128xf32>
    %23 = arith.addf %22, %21 : vector<8x128xf32>
    %24 = math.log %23 : vector<8x128xf32>
    %25 = arith.addf %17, %24 : vector<8x128xf32>
    %26 = vector.extract_strided_slice %25 {offsets = [0, 0], sizes = [8, 32], strides = [1, 1]} : vector<8x128xf32> to vector<8x32xf32>
    %27 = vector.extract_strided_slice %25 {offsets = [0, 32], sizes = [8, 32], strides = [1, 1]} : vector<8x128xf32> to vector<8x32xf32>
    %28 = vector.extract_strided_slice %25 {offsets = [0, 64], sizes = [8, 1], strides = [1, 1]} : vector<8x128xf32> to vector<8x1xf32>
    %c0_13 = arith.constant 0 : index
    %c0_14 = arith.constant 0 : index
    %c0_15 = arith.constant 0 : index
    %29 = vector.load %arg8[%c0_13, %c0_14, %c0_15] : memref<3x8x32xf32, #tpu.memory_space<vmem>>, vector<1x8x32xf32>
    %30 = vector.shape_cast %29 : vector<1x8x32xf32> to vector<8x32xf32>
    %c0_16 = arith.constant 0 : index
    %c0_17 = arith.constant 0 : index
    %c0_18 = arith.constant 0 : index
    %31 = vector.load %arg9[%c0_16, %c0_17, %c0_18] : memref<10x8x32xf32, #tpu.memory_space<vmem>>, vector<10x8x32xf32>
    %cst_19 = arith.constant 1.000000e+01 : f32
    %32 = vector.broadcast %cst_19 : f32 to vector<8x32xf32>
    %33 = arith.addf %26, %32 : vector<8x32xf32>
    %cst_20 = arith.constant 0.333333343 : f32
    %34 = vector.broadcast %cst_20 : f32 to vector<8x32xf32>
    %35 = arith.subf %33, %34 : vector<8x32xf32>
    %cst_21 = arith.constant 9.000000e+00 : f32
    %36 = vector.broadcast %cst_21 : f32 to vector<8x32xf32>
    %37 = arith.mulf %36, %33 : vector<8x32xf32>
    %cst_22 = arith.constant 3.000000e+00 : f32
    %38 = vector.broadcast %cst_22 : f32 to vector<8x32xf32>
    %39 = arith.subf %37, %38 : vector<8x32xf32>
    %40 = math.sqrt %39 : vector<8x32xf32>
    %41 = arith.divf %30, %40 : vector<8x32xf32>
    %cst_23 = arith.constant 1.000000e+00 : f32
    %42 = vector.broadcast %cst_23 : f32 to vector<8x32xf32>
    %43 = arith.addf %42, %41 : vector<8x32xf32>
    %44 = arith.mulf %35, %43 : vector<8x32xf32>
    %45 = arith.mulf %44, %43 : vector<8x32xf32>
    %46 = arith.mulf %45, %43 : vector<8x32xf32>
    %cst_24 = arith.constant 9.99999997E-7 : f32
    %47 = vector.broadcast %cst_24 : f32 to vector<8x32xf32>
    %48 = arith.maximumf %46, %47 : vector<8x32xf32>
    %cst_25 = arith.constant 0.000000e+00 : f32
    %49 = vector.broadcast %cst_25 : f32 to vector<8x32xf32>
    %50 = vector.extract_strided_slice %31 {offsets = [0, 0, 0], sizes = [1, 8, 32], strides = [1, 1, 1]} : vector<10x8x32xf32> to vector<1x8x32xf32>
    %51 = vector.shape_cast %50 : vector<1x8x32xf32> to vector<8x32xf32>
    %cst_26 = arith.constant 9.99999996E-13 : f32
    %52 = vector.broadcast %cst_26 : f32 to vector<8x32xf32>
    %53 = arith.addf %26, %52 : vector<8x32xf32>
    %54 = arith.divf %51, %53 : vector<8x32xf32>
    %55 = arith.addf %49, %54 : vector<8x32xf32>
    %56 = vector.extract_strided_slice %31 {offsets = [1, 0, 0], sizes = [1, 8, 32], strides = [1, 1, 1]} : vector<10x8x32xf32> to vector<1x8x32xf32>
    %57 = vector.shape_cast %56 : vector<1x8x32xf32> to vector<8x32xf32>
    %cst_27 = arith.constant 1.000000e+00 : f32
    %58 = vector.broadcast %cst_27 : f32 to vector<8x32xf32>
    %59 = arith.addf %26, %58 : vector<8x32xf32>
    %60 = arith.divf %57, %59 : vector<8x32xf32>
    %61 = arith.addf %55, %60 : vector<8x32xf32>
    %62 = vector.extract_strided_slice %31 {offsets = [2, 0, 0], sizes = [1, 8, 32], strides = [1, 1, 1]} : vector<10x8x32xf32> to vector<1x8x32xf32>
    %63 = vector.shape_cast %62 : vector<1x8x32xf32> to vector<8x32xf32>
    %cst_28 = arith.constant 2.000000e+00 : f32
    %64 = vector.broadcast %cst_28 : f32 to vector<8x32xf32>
    %65 = arith.addf %26, %64 : vector<8x32xf32>
    %66 = arith.divf %63, %65 : vector<8x32xf32>
    %67 = arith.addf %61, %66 : vector<8x32xf32>
    %68 = vector.extract_strided_slice %31 {offsets = [3, 0, 0], sizes = [1, 8, 32], strides = [1, 1, 1]} : vector<10x8x32xf32> to vector<1x8x32xf32>
    %69 = vector.shape_cast %68 : vector<1x8x32xf32> to vector<8x32xf32>
    %cst_29 = arith.constant 3.000000e+00 : f32
    %70 = vector.broadcast %cst_29 : f32 to vector<8x32xf32>
    %71 = arith.addf %26, %70 : vector<8x32xf32>
    %72 = arith.divf %69, %71 : vector<8x32xf32>
    %73 = arith.addf %67, %72 : vector<8x32xf32>
    %74 = vector.extract_strided_slice %31 {offsets = [4, 0, 0], sizes = [1, 8, 32], strides = [1, 1, 1]} : vector<10x8x32xf32> to vector<1x8x32xf32>
    %75 = vector.shape_cast %74 : vector<1x8x32xf32> to vector<8x32xf32>
    %cst_30 = arith.constant 4.000000e+00 : f32
    %76 = vector.broadcast %cst_30 : f32 to vector<8x32xf32>
    %77 = arith.addf %26, %76 : vector<8x32xf32>
    %78 = arith.divf %75, %77 : vector<8x32xf32>
    %79 = arith.addf %73, %78 : vector<8x32xf32>
    %80 = vector.extract_strided_slice %31 {offsets = [5, 0, 0], sizes = [1, 8, 32], strides = [1, 1, 1]} : vector<10x8x32xf32> to vector<1x8x32xf32>
    %81 = vector.shape_cast %80 : vector<1x8x32xf32> to vector<8x32xf32>
    %cst_31 = arith.constant 5.000000e+00 : f32
    %82 = vector.broadcast %cst_31 : f32 to vector<8x32xf32>
    %83 = arith.addf %26, %82 : vector<8x32xf32>
    %84 = arith.divf %81, %83 : vector<8x32xf32>
    %85 = arith.addf %79, %84 : vector<8x32xf32>
    %86 = vector.extract_strided_slice %31 {offsets = [6, 0, 0], sizes = [1, 8, 32], strides = [1, 1, 1]} : vector<10x8x32xf32> to vector<1x8x32xf32>
    %87 = vector.shape_cast %86 : vector<1x8x32xf32> to vector<8x32xf32>
    %cst_32 = arith.constant 6.000000e+00 : f32
    %88 = vector.broadcast %cst_32 : f32 to vector<8x32xf32>
    %89 = arith.addf %26, %88 : vector<8x32xf32>
    %90 = arith.divf %87, %89 : vector<8x32xf32>
    %91 = arith.addf %85, %90 : vector<8x32xf32>
    %92 = vector.extract_strided_slice %31 {offsets = [7, 0, 0], sizes = [1, 8, 32], strides = [1, 1, 1]} : vector<10x8x32xf32> to vector<1x8x32xf32>
    %93 = vector.shape_cast %92 : vector<1x8x32xf32> to vector<8x32xf32>
    %cst_33 = arith.constant 7.000000e+00 : f32
    %94 = vector.broadcast %cst_33 : f32 to vector<8x32xf32>
    %95 = arith.addf %26, %94 : vector<8x32xf32>
    %96 = arith.divf %93, %95 : vector<8x32xf32>
    %97 = arith.addf %91, %96 : vector<8x32xf32>
    %98 = vector.extract_strided_slice %31 {offsets = [8, 0, 0], sizes = [1, 8, 32], strides = [1, 1, 1]} : vector<10x8x32xf32> to vector<1x8x32xf32>
    %99 = vector.shape_cast %98 : vector<1x8x32xf32> to vector<8x32xf32>
    %cst_34 = arith.constant 8.000000e+00 : f32
    %100 = vector.broadcast %cst_34 : f32 to vector<8x32xf32>
    %101 = arith.addf %26, %100 : vector<8x32xf32>
    %102 = arith.divf %99, %101 : vector<8x32xf32>
    %103 = arith.addf %97, %102 : vector<8x32xf32>
    %104 = vector.extract_strided_slice %31 {offsets = [9, 0, 0], sizes = [1, 8, 32], strides = [1, 1, 1]} : vector<10x8x32xf32> to vector<1x8x32xf32>
    %105 = vector.shape_cast %104 : vector<1x8x32xf32> to vector<8x32xf32>
    %cst_35 = arith.constant 9.000000e+00 : f32
    %106 = vector.broadcast %cst_35 : f32 to vector<8x32xf32>
    %107 = arith.addf %26, %106 : vector<8x32xf32>
    %108 = arith.divf %105, %107 : vector<8x32xf32>
    %109 = arith.addf %103, %108 : vector<8x32xf32>
    %110 = math.exp %109 : vector<8x32xf32>
    %111 = arith.mulf %48, %110 : vector<8x32xf32>
    %112 = arith.mulf %111, %27 : vector<8x32xf32>
    %c1 = arith.constant 1 : index
    %c0_36 = arith.constant 0 : index
    %c0_37 = arith.constant 0 : index
    %113 = vector.load %arg8[%c1, %c0_36, %c0_37] : memref<3x8x32xf32, #tpu.memory_space<vmem>>, vector<1x8x32xf32>
    %114 = vector.shape_cast %113 : vector<1x8x32xf32> to vector<8x32xf32>
    %c0_38 = arith.constant 0 : index
    %c0_39 = arith.constant 0 : index
    %c0_40 = arith.constant 0 : index
    %115 = vector.load %arg10[%c0_38, %c0_39, %c0_40] : memref<10x8x32xf32, #tpu.memory_space<vmem>>, vector<10x8x32xf32>
    %cst_41 = arith.constant 1.000000e+01 : f32
    %116 = vector.broadcast %cst_41 : f32 to vector<8x32xf32>
    %117 = arith.addf %112, %116 : vector<8x32xf32>
    %cst_42 = arith.constant 0.333333343 : f32
    %118 = vector.broadcast %cst_42 : f32 to vector<8x32xf32>
    %119 = arith.subf %117, %118 : vector<8x32xf32>
    %cst_43 = arith.constant 9.000000e+00 : f32
    %120 = vector.broadcast %cst_43 : f32 to vector<8x32xf32>
    %121 = arith.mulf %120, %117 : vector<8x32xf32>
    %cst_44 = arith.constant 3.000000e+00 : f32
    %122 = vector.broadcast %cst_44 : f32 to vector<8x32xf32>
    %123 = arith.subf %121, %122 : vector<8x32xf32>
    %124 = math.sqrt %123 : vector<8x32xf32>
    %125 = arith.divf %114, %124 : vector<8x32xf32>
    %cst_45 = arith.constant 1.000000e+00 : f32
    %126 = vector.broadcast %cst_45 : f32 to vector<8x32xf32>
    %127 = arith.addf %126, %125 : vector<8x32xf32>
    %128 = arith.mulf %119, %127 : vector<8x32xf32>
    %129 = arith.mulf %128, %127 : vector<8x32xf32>
    %130 = arith.mulf %129, %127 : vector<8x32xf32>
    %cst_46 = arith.constant 9.99999997E-7 : f32
    %131 = vector.broadcast %cst_46 : f32 to vector<8x32xf32>
    %132 = arith.maximumf %130, %131 : vector<8x32xf32>
    %cst_47 = arith.constant 0.000000e+00 : f32
    %133 = vector.broadcast %cst_47 : f32 to vector<8x32xf32>
    %134 = vector.extract_strided_slice %115 {offsets = [0, 0, 0], sizes = [1, 8, 32], strides = [1, 1, 1]} : vector<10x8x32xf32> to vector<1x8x32xf32>
    %135 = vector.shape_cast %134 : vector<1x8x32xf32> to vector<8x32xf32>
    %cst_48 = arith.constant 9.99999996E-13 : f32
    %136 = vector.broadcast %cst_48 : f32 to vector<8x32xf32>
    %137 = arith.addf %112, %136 : vector<8x32xf32>
    %138 = arith.divf %135, %137 : vector<8x32xf32>
    %139 = arith.addf %133, %138 : vector<8x32xf32>
    %140 = vector.extract_strided_slice %115 {offsets = [1, 0, 0], sizes = [1, 8, 32], strides = [1, 1, 1]} : vector<10x8x32xf32> to vector<1x8x32xf32>
    %141 = vector.shape_cast %140 : vector<1x8x32xf32> to vector<8x32xf32>
    %cst_49 = arith.constant 1.000000e+00 : f32
    %142 = vector.broadcast %cst_49 : f32 to vector<8x32xf32>
    %143 = arith.addf %112, %142 : vector<8x32xf32>
    %144 = arith.divf %141, %143 : vector<8x32xf32>
    %145 = arith.addf %139, %144 : vector<8x32xf32>
    %146 = vector.extract_strided_slice %115 {offsets = [2, 0, 0], sizes = [1, 8, 32], strides = [1, 1, 1]} : vector<10x8x32xf32> to vector<1x8x32xf32>
    %147 = vector.shape_cast %146 : vector<1x8x32xf32> to vector<8x32xf32>
    %cst_50 = arith.constant 2.000000e+00 : f32
    %148 = vector.broadcast %cst_50 : f32 to vector<8x32xf32>
    %149 = arith.addf %112, %148 : vector<8x32xf32>
    %150 = arith.divf %147, %149 : vector<8x32xf32>
    %151 = arith.addf %145, %150 : vector<8x32xf32>
    %152 = vector.extract_strided_slice %115 {offsets = [3, 0, 0], sizes = [1, 8, 32], strides = [1, 1, 1]} : vector<10x8x32xf32> to vector<1x8x32xf32>
    %153 = vector.shape_cast %152 : vector<1x8x32xf32> to vector<8x32xf32>
    %cst_51 = arith.constant 3.000000e+00 : f32
    %154 = vector.broadcast %cst_51 : f32 to vector<8x32xf32>
    %155 = arith.addf %112, %154 : vector<8x32xf32>
    %156 = arith.divf %153, %155 : vector<8x32xf32>
    %157 = arith.addf %151, %156 : vector<8x32xf32>
    %158 = vector.extract_strided_slice %115 {offsets = [4, 0, 0], sizes = [1, 8, 32], strides = [1, 1, 1]} : vector<10x8x32xf32> to vector<1x8x32xf32>
    %159 = vector.shape_cast %158 : vector<1x8x32xf32> to vector<8x32xf32>
    %cst_52 = arith.constant 4.000000e+00 : f32
    %160 = vector.broadcast %cst_52 : f32 to vector<8x32xf32>
    %161 = arith.addf %112, %160 : vector<8x32xf32>
    %162 = arith.divf %159, %161 : vector<8x32xf32>
    %163 = arith.addf %157, %162 : vector<8x32xf32>
    %164 = vector.extract_strided_slice %115 {offsets = [5, 0, 0], sizes = [1, 8, 32], strides = [1, 1, 1]} : vector<10x8x32xf32> to vector<1x8x32xf32>
    %165 = vector.shape_cast %164 : vector<1x8x32xf32> to vector<8x32xf32>
    %cst_53 = arith.constant 5.000000e+00 : f32
    %166 = vector.broadcast %cst_53 : f32 to vector<8x32xf32>
    %167 = arith.addf %112, %166 : vector<8x32xf32>
    %168 = arith.divf %165, %167 : vector<8x32xf32>
    %169 = arith.addf %163, %168 : vector<8x32xf32>
    %170 = vector.extract_strided_slice %115 {offsets = [6, 0, 0], sizes = [1, 8, 32], strides = [1, 1, 1]} : vector<10x8x32xf32> to vector<1x8x32xf32>
    %171 = vector.shape_cast %170 : vector<1x8x32xf32> to vector<8x32xf32>
    %cst_54 = arith.constant 6.000000e+00 : f32
    %172 = vector.broadcast %cst_54 : f32 to vector<8x32xf32>
    %173 = arith.addf %112, %172 : vector<8x32xf32>
    %174 = arith.divf %171, %173 : vector<8x32xf32>
    %175 = arith.addf %169, %174 : vector<8x32xf32>
    %176 = vector.extract_strided_slice %115 {offsets = [7, 0, 0], sizes = [1, 8, 32], strides = [1, 1, 1]} : vector<10x8x32xf32> to vector<1x8x32xf32>
    %177 = vector.shape_cast %176 : vector<1x8x32xf32> to vector<8x32xf32>
    %cst_55 = arith.constant 7.000000e+00 : f32
    %178 = vector.broadcast %cst_55 : f32 to vector<8x32xf32>
    %179 = arith.addf %112, %178 : vector<8x32xf32>
    %180 = arith.divf %177, %179 : vector<8x32xf32>
    %181 = arith.addf %175, %180 : vector<8x32xf32>
    %182 = vector.extract_strided_slice %115 {offsets = [8, 0, 0], sizes = [1, 8, 32], strides = [1, 1, 1]} : vector<10x8x32xf32> to vector<1x8x32xf32>
    %183 = vector.shape_cast %182 : vector<1x8x32xf32> to vector<8x32xf32>
    %cst_56 = arith.constant 8.000000e+00 : f32
    %184 = vector.broadcast %cst_56 : f32 to vector<8x32xf32>
    %185 = arith.addf %112, %184 : vector<8x32xf32>
    %186 = arith.divf %183, %185 : vector<8x32xf32>
    %187 = arith.addf %181, %186 : vector<8x32xf32>
    %188 = vector.extract_strided_slice %115 {offsets = [9, 0, 0], sizes = [1, 8, 32], strides = [1, 1, 1]} : vector<10x8x32xf32> to vector<1x8x32xf32>
    %189 = vector.shape_cast %188 : vector<1x8x32xf32> to vector<8x32xf32>
    %cst_57 = arith.constant 9.000000e+00 : f32
    %190 = vector.broadcast %cst_57 : f32 to vector<8x32xf32>
    %191 = arith.addf %112, %190 : vector<8x32xf32>
    %192 = arith.divf %189, %191 : vector<8x32xf32>
    %193 = arith.addf %187, %192 : vector<8x32xf32>
    %194 = math.exp %193 : vector<8x32xf32>
    %195 = arith.mulf %132, %194 : vector<8x32xf32>
    %196 = vector.broadcast %28 : vector<8x1xf32> to vector<8x32xf32>
    %197 = arith.mulf %195, %196 : vector<8x32xf32>
    %c2 = arith.constant 2 : index
    %c0_58 = arith.constant 0 : index
    %c0_59 = arith.constant 0 : index
    %198 = vector.load %arg8[%c2, %c0_58, %c0_59] : memref<3x8x32xf32, #tpu.memory_space<vmem>>, vector<1x8x32xf32>
    %199 = vector.shape_cast %198 : vector<1x8x32xf32> to vector<8x32xf32>
    %cst_60 = arith.constant 0.000000e+00 : f32
    %200 = vector.broadcast %cst_60 : f32 to vector<8x32xf32>
    %201 = arith.maximumf %197, %200 : vector<8x32xf32>
    %cst_61 = arith.constant 9.99999996E-13 : f32
    %202 = vector.broadcast %cst_61 : f32 to vector<8x32xf32>
    %203 = arith.addf %201, %202 : vector<8x32xf32>
    %204 = math.sqrt %203 : vector<8x32xf32>
    %205 = arith.mulf %204, %199 : vector<8x32xf32>
    %206 = arith.addf %201, %205 : vector<8x32xf32>
    %cst_62 = arith.constant 5.000000e-01 : f32
    %207 = vector.broadcast %cst_62 : f32 to vector<8x32xf32>
    %208 = arith.addf %206, %207 : vector<8x32xf32>
    %209 = math.floor %208 : vector<8x32xf32>
    %cst_63 = arith.constant 0.000000e+00 : f32
    %210 = vector.broadcast %cst_63 : f32 to vector<8x32xf32>
    %211 = arith.maximumf %209, %210 : vector<8x32xf32>
    %212 = arith.addf %211, %112 : vector<8x32xf32>
    %cst_64 = arith.constant 0.000000e+00 : f32
    %213 = vector.broadcast %cst_64 : f32 to vector<8x32xf32>
    %214 = arith.subf %213, %212 : vector<8x32xf32>
    %215 = math.exp %214 : vector<8x32xf32>
    %cst_65 = arith.constant 1.000000e+00 : f32
    %216 = vector.broadcast %cst_65 : f32 to vector<8x32xf32>
    %217 = arith.addf %216, %215 : vector<8x32xf32>
    %cst_66 = arith.constant 1.000000e+00 : f32
    %218 = vector.broadcast %cst_66 : f32 to vector<8x32xf32>
    %219 = arith.divf %218, %217 : vector<8x32xf32>
    %220 = arith.truncf %219 : vector<8x32xf32> to vector<8x32xbf16>
    %c0_67 = arith.constant 0 : index
    %c0_68 = arith.constant 0 : index
    %221 = vector.load %arg6[%c0_67, %c0_68] : memref<32x128xf32, #tpu.memory_space<vmem>>, vector<32x128xf32>
    %222 = arith.truncf %221 : vector<32x128xf32> to vector<32x128xbf16>
    %cst_69 = arith.constant dense<0.000000e+00> : vector<8x128xf32>
    %223 = tpu.matmul %220, %222, %cst_69 {dimension_numbers = #tpu.dot_dimension_numbers<[1], [0], [0], [1], [0, 0, 1, 1], [], []>} : vector<8x32xbf16>, vector<32x128xbf16>, vector<8x128xf32> -> vector<8x128xf32>
    %c0_70 = arith.constant 0 : index
    %c0_71 = arith.constant 0 : index
    %224 = vector.load %arg7[%c0_70, %c0_71] : memref<1x128xf32, #tpu.memory_space<vmem>>, vector<1x128xf32>
    %225 = vector.broadcast %224 : vector<1x128xf32> to vector<8x128xf32>
    %226 = arith.addf %223, %225 : vector<8x128xf32>
    %cst_72 = arith.constant 0.000000e+00 : f32
    %227 = vector.broadcast %cst_72 : f32 to vector<8x32xf32>
    %228 = tpu.concatenate %26, %27, %197, %227 in 1 : vector<8x32xf32>, vector<8x32xf32>, vector<8x32xf32>, vector<8x32xf32> -> vector<8x128xf32>
    %c0_73 = arith.constant 0 : index
    %c0_74 = arith.constant 0 : index
    %229 = vector.load %arg11[%c0_73, %c0_74] : memref<8x128xf32, #tpu.memory_space<vmem>>, vector<8x128xf32>
    tpu.vector_store %arg11[%c0_73, %c0_74], %228 {strides = array<i32>} : memref<8x128xf32, #tpu.memory_space<vmem>>, vector<8x128xf32>,
    %c0_75 = arith.constant 0 : index
    %c0_76 = arith.constant 0 : index
    %230 = vector.load %arg12[%c0_75, %c0_76] : memref<8x128xf32, #tpu.memory_space<vmem>>, vector<8x128xf32>
    tpu.vector_store %arg12[%c0_75, %c0_76], %226 {strides = array<i32>} : memref<8x128xf32, #tpu.memory_space<vmem>>, vector<8x128xf32>,
    return
  }
  func.func @transform_0(%arg0: i32) -> (i32, i32) {
    %c0_i32 = arith.constant 0 : i32
    %c0_i32_0 = arith.constant 0 : i32
    return %arg0, %c0_i32 : i32, i32
  }
  func.func @transform_1(%arg0: i32) -> (i32, i32) {
    %c0_i32 = arith.constant 0 : i32
    %c0_i32_0 = arith.constant 0 : i32
    %c0_i32_1 = arith.constant 0 : i32
    return %c0_i32, %c0_i32_0 : i32, i32
  }
  func.func @transform_2(%arg0: i32) -> (i32, i32) {
    %c0_i32 = arith.constant 0 : i32
    %c0_i32_0 = arith.constant 0 : i32
    %c0_i32_1 = arith.constant 0 : i32
    return %c0_i32, %c0_i32_0 : i32, i32
  }
  func.func @transform_3(%arg0: i32) -> (i32, i32) {
    %c0_i32 = arith.constant 0 : i32
    %c0_i32_0 = arith.constant 0 : i32
    %c0_i32_1 = arith.constant 0 : i32
    return %c0_i32, %c0_i32_0 : i32, i32
  }
  func.func @transform_4(%arg0: i32) -> (i32, i32) {
    %c0_i32 = arith.constant 0 : i32
    %c0_i32_0 = arith.constant 0 : i32
    %c0_i32_1 = arith.constant 0 : i32
    return %c0_i32, %c0_i32_0 : i32, i32
  }
  func.func @transform_5(%arg0: i32) -> (i32, i32) {
    %c0_i32 = arith.constant 0 : i32
    %c0_i32_0 = arith.constant 0 : i32
    %c0_i32_1 = arith.constant 0 : i32
    return %c0_i32, %c0_i32_0 : i32, i32
  }
  func.func @transform_6(%arg0: i32) -> (i32, i32) {
    %c0_i32 = arith.constant 0 : i32
    %c0_i32_0 = arith.constant 0 : i32
    %c0_i32_1 = arith.constant 0 : i32
    return %c0_i32, %c0_i32_0 : i32, i32
  }
  func.func @transform_7(%arg0: i32) -> (i32, i32, i32) {
    %c0_i32 = arith.constant 0 : i32
    %c0_i32_0 = arith.constant 0 : i32
    %c0_i32_1 = arith.constant 0 : i32
    return %c0_i32, %arg0, %c0_i32_0 : i32, i32, i32
  }
  func.func @transform_8(%arg0: i32) -> (i32, i32, i32) {
    %c0_i32 = arith.constant 0 : i32
    %c0_i32_0 = arith.constant 0 : i32
    %c0_i32_1 = arith.constant 0 : i32
    return %c0_i32, %arg0, %c0_i32_0 : i32, i32, i32
  }
  func.func @transform_9(%arg0: i32) -> (i32, i32, i32) {
    %c0_i32 = arith.constant 0 : i32
    %c0_i32_0 = arith.constant 0 : i32
    %c0_i32_1 = arith.constant 0 : i32
    return %c0_i32, %arg0, %c0_i32_0 : i32, i32, i32
  }
  func.func @transform_10(%arg0: i32) -> (i32, i32) {
    %c0_i32 = arith.constant 0 : i32
    %c0_i32_0 = arith.constant 0 : i32
    return %arg0, %c0_i32 : i32, i32
  }
  func.func @transform_11(%arg0: i32) -> (i32, i32) {
    %c0_i32 = arith.constant 0 : i32
    %c0_i32_0 = arith.constant 0 : i32
    return %arg0, %c0_i32 : i32, i32
  }
}

</mosaic_0001>

<llo_original>
// kernel: tpu_custom_call.1
$region0: #{tpu_custom_call.1}
  #allocation0 [shape = 'u32[]', space=smem, size = 0x4, offset = 0x4, fixed_abs, tag = 'smem constant byte address 0x4 - core index']
  #allocation1 [shape = 'u32[144,128]{1,0:T(1,128)}', space=vmem, size = 0x12000, scoped, tag = 'internal scratch']
  %s0 = inlined_call_operand.hbm [shape: f32[16,128], index: 0, kind: input, shape index: {}]
  %s1 = inlined_call_operand.vmem [shape: f32[128,64], index: 1, kind: input, shape index: {}]
  %s2 = inlined_call_operand.vmem [shape: f32[1,64], index: 2, kind: input, shape index: {}]
  %s3 = inlined_call_operand.hbm [shape: f32[64,128], index: 3, kind: input, shape index: {}]
  %s4 = inlined_call_operand.vmem [shape: f32[1,128], index: 4, kind: input, shape index: {}]
  %s5 = inlined_call_operand.hbm [shape: f32[32,128], index: 5, kind: input, shape index: {}]
  %s6 = inlined_call_operand.vmem [shape: f32[1,128], index: 6, kind: input, shape index: {}]
  %s7 = inlined_call_operand.vmem [shape: f32[3,16,32], index: 7, kind: input, shape index: {}]
  %s8 = inlined_call_operand.vmem [shape: f32[10,16,32], index: 8, kind: input, shape index: {}]
  %s9 = inlined_call_operand.hbm [shape: f32[10,16,32], index: 9, kind: input, shape index: {}]
  %s10 = inlined_call_operand.hbm [shape: f32[16,128], index: 10, kind: output, shape index: {0}]
  %s11 = inlined_call_operand.hbm [shape: f32[16,128], index: 11, kind: output, shape index: {1}]
  %12 = xla_tuple %s10, %s11
  %s13 = sld [smem:[#allocation0]]
  $region173: #{tpu_custom_call.1} parent=0
    _
  %s15 = ssub.s32 1, %s13
  %s16 = scalar_select 0, %s15, %s13
  $region1: #{tpu_custom_call.1} parent=0
    #allocation2 [shape = 'u8[8192]{0}', space=vmem, size = 0x2000, scoped, tag = 'input window, operand 0']
    #allocation3 [shape = 's32[2]{0}', space=sflag, size = 0x8, scoped, tag = 'scoped memory for tpu_custom_call.1']
    #allocation4 [shape = 's32[2]{0}', space=sflag, size = 0x8, scoped, tag = 'scoped memory for tpu_custom_call.1']
    #allocation5 [shape = 'u8[32768]{0}', space=vmem, size = 0x8000, scoped, tag = 'input window, operand 3, single buffered']
    #allocation6 [shape = 's32[1]{0}', space=sflag, size = 0x4, scoped, tag = 'scoped memory for tpu_custom_call.1']
    #allocation7 [shape = 'u8[16384]{0}', space=vmem, size = 0x4000, scoped, tag = 'input window, operand 5, single buffered']
    #allocation8 [shape = 'u8[24576]{0}', space=vmem, size = 0x6000, scoped, tag = 'input window, operand 7']
    #allocation9 [shape = 'u8[81920]{0}', space=vmem, size = 0x14000, scoped, tag = 'input window, operand 8']
    #allocation10 [shape = 'u8[81920]{0}', space=vmem, size = 0x14000, scoped, tag = 'input window, operand 9']
    #allocation11 [shape = 's32[2]{0}', space=sflag, size = 0x8, scoped, tag = 'scoped memory for tpu_custom_call.1']
    #allocation12 [shape = 'u8[8192]{0}', space=vmem, size = 0x2000, scoped, tag = 'output window, operand 0']
    #allocation13 [shape = 'u8[8192]{0}', space=vmem, size = 0x2000, scoped, tag = 'output window, operand 1']
    #allocation14 [shape = 's32[2]{0}', space=sflag, size = 0x8, scoped, tag = 'scoped memory for tpu_custom_call.1']
    %17 = vsyncpa [#allocation3], 0
    %s18 = scalar_lea.sflag [#allocation3], 1
    %19 = vsyncpa %s18, 0
    %20 = vsyncpa [#allocation6], 0
    %21 = vsyncpa [#allocation11], 0
    %s22 = scalar_lea.sflag [#allocation11], 1
    %23 = vsyncpa %s22, 0
    %24 = vsyncpa [#allocation4], 0
    %s25 = scalar_lea.sflag [#allocation4], 1
    %26 = vsyncpa %s25, 0
    %27 = vsyncpa [#allocation14], 0
    %s28 = scalar_lea.sflag [#allocation14], 1
    %29 = vsyncpa %s28, 0
    loop: start=0, step=1, limit=4
    $region2: #{tpu_custom_call.1} parent=1 // loop_pre_header
      _
    $region3: #{tpu_custom_call.1} parent=1 // loop_header
      %s31 = sphi 0, %s35
      %p32 = scmp.ge.s32.totalorder %s31, 4
      %s41 = sphi 0, %s43
      %s44 = sphi 0, %s41
      %s45 = sphi 0, %s44
      %s61 = sphi 0, %s45
      %s65 = sphi 0, %s65
      %s67 = sphi 0, %s65
      %s68 = sphi 0, %s67
      %s82 = sphi 0, %s68
      %s86 = sphi 0, %s86
      %s88 = sphi 0, %s86
      %s89 = sphi 0, %s88
      %s103 = sphi 0, %s89
      %s107 = sphi 0, %s107
      %s109 = sphi 0, %s107
      %s110 = sphi 0, %s109
      %s124 = sphi 0, %s110
      %s128 = sphi 0, %s128
      %s130 = sphi 0, %s128
      %s131 = sphi 0, %s130
      %s145 = sphi 0, %s131
      %s149 = sphi 0, %s149
      %s151 = sphi 0, %s149
      %s152 = sphi 0, %s151
      %s166 = sphi 0, %s152
      %s170 = sphi 0, %s170
      %s172 = sphi 0, %s170
      %s173 = sphi 0, %s172
      %s187 = sphi 0, %s173
      %s193 = sphi 0, %s195
      %s196 = sphi 0, %s193
      %s197 = sphi 0, %s196
      %s213 = sphi 0, %s197
      %s219 = sphi 0, %s221
      %s222 = sphi 0, %s219
      %s223 = sphi 0, %s222
      %s239 = sphi 0, %s223
      %s245 = sphi 0, %s247
      %s248 = sphi 0, %s245
      %s249 = sphi 0, %s248
      %s265 = sphi 0, %s249
      %s271 = sphi 0, %s273
      %s274 = sphi 0, %s271
      %s275 = sphi 0, %s274
      %s291 = sphi 0, %s275
      %s297 = sphi 0, %s299
      %s300 = sphi 0, %s297
      %s301 = sphi 0, %s300
      %s317 = sphi 0, %s301
    $region4: #{tpu_custom_call.1} parent=1 // loop_header_branch
      %34 = sbr.rel (%p32) target = $region8
    $region5: #{tpu_custom_call.1} parent=1 // loop_body
      %s36 = ssub.s32 %s31, 1
      %s37 = ssub.s32 %s31, 2
      %s38 = sadd.s32 %s31, 1
      %s39 = ssub.s32 %s31, %s38
      %p40 = scmp.eq.s32.totalorder %s39, 0
      %s42 = sadd.s32 %s41, 1
      %s43 = scalar_select %p40, %s41, %s42
      %p46 = pneg %p40
      %p47 = scmp.eq.s32.totalorder %s31, 1
      %p48 = por %p46, %p47
      %p49 = scmp.ne.s32.totalorder %s41, %s44
      %p50 = scmp.eq.s32.totalorder %s31, 0
      %p51 = por %p49, %p50
      %p52 = scmp.ne.s32.totalorder %s41, %s44
      %p53 = scmp.eq.s32.totalorder %s36, 1
      %p54 = por %p52, %p53
      %p55 = scmp.ne.s32.totalorder %s44, %s45
      %p56 = scmp.eq.s32.totalorder %s36, 0
      %p57 = por %p55, %p56
      %p58 = scmp.ne.s32.totalorder %s44, %s45
      %p59 = scmp.eq.s32.totalorder %s37, 1
      %p60 = por %p58, %p59
      %p62 = scmp.ne.s32.totalorder %s45, %s61
      %p63 = scmp.eq.s32.totalorder %s37, 0
      %p64 = por %p62, %p63
      %s66 = sadd.s32 %s65, 1
      %p69 = scmp.eq.s32.totalorder %s31, 1
      %p70 = scmp.ne.s32.totalorder %s65, %s67
      %p71 = scmp.eq.s32.totalorder %s31, 0
      %p72 = por %p70, %p71
      %p73 = scmp.ne.s32.totalorder %s65, %s67
      %p74 = scmp.eq.s32.totalorder %s36, 1
      %p75 = por %p73, %p74
      %p76 = scmp.ne.s32.totalorder %s67, %s68
      %p77 = scmp.eq.s32.totalorder %s36, 0
      %p78 = por %p76, %p77
      %p79 = scmp.ne.s32.totalorder %s67, %s68
      %p80 = scmp.eq.s32.totalorder %s37, 1
      %p81 = por %p79, %p80
      %p83 = scmp.ne.s32.totalorder %s68, %s82
      %p84 = scmp.eq.s32.totalorder %s37, 0
      %p85 = por %p83, %p84
      %s87 = sadd.s32 %s86, 1
      %p90 = scmp.eq.s32.totalorder %s31, 1
      %p91 = scmp.ne.s32.totalorder %s86, %s88
      %p92 = scmp.eq.s32.totalorder %s31, 0
      %p93 = por %p91, %p92
      %p94 = scmp.ne.s32.totalorder %s86, %s88
      %p95 = scmp.eq.s32.totalorder %s36, 1
      %p96 = por %p94, %p95
      %p97 = scmp.ne.s32.totalorder %s88, %s89
      %p98 = scmp.eq.s32.totalorder %s36, 0
      %p99 = por %p97, %p98
      %p100 = scmp.ne.s32.totalorder %s88, %s89
      %p101 = scmp.eq.s32.totalorder %s37, 1
      %p102 = por %p100, %p101
      %p104 = scmp.ne.s32.totalorder %s89, %s103
      %p105 = scmp.eq.s32.totalorder %s37, 0
      %p106 = por %p104, %p105
      %s108 = sadd.s32 %s107, 1
      %p111 = scmp.eq.s32.totalorder %s31, 1
      %p112 = scmp.ne.s32.totalorder %s107, %s109
      %p113 = scmp.eq.s32.totalorder %s31, 0
      %p114 = por %p112, %p113
      %p115 = scmp.ne.s32.totalorder %s107, %s109
      %p116 = scmp.eq.s32.totalorder %s36, 1
      %p117 = por %p115, %p116
      %p118 = scmp.ne.s32.totalorder %s109, %s110
      %p119 = scmp.eq.s32.totalorder %s36, 0
      %p120 = por %p118, %p119
      %p121 = scmp.ne.s32.totalorder %s109, %s110
      %p122 = scmp.eq.s32.totalorder %s37, 1
      %p123 = por %p121, %p122
      %p125 = scmp.ne.s32.totalorder %s110, %s124
      %p126 = scmp.eq.s32.totalorder %s37, 0
      %p127 = por %p125, %p126
      %s129 = sadd.s32 %s128, 1
      %p132 = scmp.eq.s32.totalorder %s31, 1
      %p133 = scmp.ne.s32.totalorder %s128, %s130
      %p134 = scmp.eq.s32.totalorder %s31, 0
      %p135 = por %p133, %p134
      %p136 = scmp.ne.s32.totalorder %s128, %s130
      %p137 = scmp.eq.s32.totalorder %s36, 1
      %p138 = por %p136, %p137
      %p139 = scmp.ne.s32.totalorder %s130, %s131
      %p140 = scmp.eq.s32.totalorder %s36, 0
      %p141 = por %p139, %p140
      %p142 = scmp.ne.s32.totalorder %s130, %s131
      %p143 = scmp.eq.s32.totalorder %s37, 1
      %p144 = por %p142, %p143
      %p146 = scmp.ne.s32.totalorder %s131, %s145
      %p147 = scmp.eq.s32.totalorder %s37, 0
      %p148 = por %p146, %p147
      %s150 = sadd.s32 %s149, 1
      %p153 = scmp.eq.s32.totalorder %s31, 1
      %p154 = scmp.ne.s32.totalorder %s149, %s151
      %p155 = scmp.eq.s32.totalorder %s31, 0
      %p156 = por %p154, %p155
      %p157 = scmp.ne.s32.totalorder %s149, %s151
      %p158 = scmp.eq.s32.totalorder %s36, 1
      %p159 = por %p157, %p158
      %p160 = scmp.ne.s32.totalorder %s151, %s152
      %p161 = scmp.eq.s32.totalorder %s36, 0
      %p162 = por %p160, %p161
      %p163 = scmp.ne.s32.totalorder %s151, %s152
      %p164 = scmp.eq.s32.totalorder %s37, 1
      %p165 = por %p163, %p164
      %p167 = scmp.ne.s32.totalorder %s152, %s166
      %p168 = scmp.eq.s32.totalorder %s37, 0
      %p169 = por %p167, %p168
      %s171 = sadd.s32 %s170, 1
      %p174 = scmp.eq.s32.totalorder %s31, 1
      %p175 = scmp.ne.s32.totalorder %s170, %s172
      %p176 = scmp.eq.s32.totalorder %s31, 0
      %p177 = por %p175, %p176
      %p178 = scmp.ne.s32.totalorder %s170, %s172
      %p179 = scmp.eq.s32.totalorder %s36, 1
      %p180 = por %p178, %p179
      %p181 = scmp.ne.s32.totalorder %s172, %s173
      %p182 = scmp.eq.s32.totalorder %s36, 0
      %p183 = por %p181, %p182
      %p184 = scmp.ne.s32.totalorder %s172, %s173
      %p185 = scmp.eq.s32.totalorder %s37, 1
      %p186 = por %p184, %p185
      %p188 = scmp.ne.s32.totalorder %s173, %s187
      %p189 = scmp.eq.s32.totalorder %s37, 0
      %p190 = por %p188, %p189
      %s191 = ssub.s32 %s31, %s38
      %p192 = scmp.eq.s32.totalorder %s191, 0
      %s194 = sadd.s32 %s193, 1
      %s195 = scalar_select %p192, %s193, %s194
      %p198 = pneg %p192
      %p199 = scmp.eq.s32.totalorder %s31, 1
      %p200 = por %p198, %p199
      %p201 = scmp.ne.s32.totalorder %s193, %s196
      %p202 = scmp.eq.s32.totalorder %s31, 0
      %p203 = por %p201, %p202
      %p204 = scmp.ne.s32.totalorder %s193, %s196
      %p205 = scmp.eq.s32.totalorder %s36, 1
      %p206 = por %p204, %p205
      %p207 = scmp.ne.s32.totalorder %s196, %s197
      %p208 = scmp.eq.s32.totalorder %s36, 0
      %p209 = por %p207, %p208
      %p210 = scmp.ne.s32.totalorder %s196, %s197
      %p211 = scmp.eq.s32.totalorder %s37, 1
      %p212 = por %p210, %p211
      %p214 = scmp.ne.s32.totalorder %s197, %s213
      %p215 = scmp.eq.s32.totalorder %s37, 0
      %p216 = por %p214, %p215
      %s217 = ssub.s32 %s31, %s38
      %p218 = scmp.eq.s32.totalorder %s217, 0
      %s220 = sadd.s32 %s219, 1
      %s221 = scalar_select %p218, %s219, %s220
      %p224 = pneg %p218
      %p225 = scmp.eq.s32.totalorder %s31, 1
      %p226 = por %p224, %p225
      %p227 = scmp.ne.s32.totalorder %s219, %s222
      %p228 = scmp.eq.s32.totalorder %s31, 0
      %p229 = por %p227, %p228
      %p230 = scmp.ne.s32.totalorder %s219, %s222
      %p231 = scmp.eq.s32.totalorder %s36, 1
      %p232 = por %p230, %p231
      %p233 = scmp.ne.s32.totalorder %s222, %s223
      %p234 = scmp.eq.s32.totalorder %s36, 0
      %p235 = por %p233, %p234
      %p236 = scmp.ne.s32.totalorder %s222, %s223
      %p237 = scmp.eq.s32.totalorder %s37, 1
      %p238 = por %p236, %p237
      %p240 = scmp.ne.s32.totalorder %s223, %s239
      %p241 = scmp.eq.s32.totalorder %s37, 0
      %p242 = por %p240, %p241
      %s243 = ssub.s32 %s31, %s38
      %p244 = scmp.eq.s32.totalorder %s243, 0
      %s246 = sadd.s32 %s245, 1
      %s247 = scalar_select %p244, %s245, %s246
      %p250 = pneg %p244
      %p251 = scmp.eq.s32.totalorder %s31, 1
      %p252 = por %p250, %p251
      %p253 = scmp.ne.s32.totalorder %s245, %s248
      %p254 = scmp.eq.s32.totalorder %s31, 0
      %p255 = por %p253, %p254
      %p256 = scmp.ne.s32.totalorder %s245, %s248
      %p257 = scmp.eq.s32.totalorder %s36, 1
      %p258 = por %p256, %p257
      %p259 = scmp.ne.s32.totalorder %s248, %s249
      %p260 = scmp.eq.s32.totalorder %s36, 0
      %p261 = por %p259, %p260
      %p262 = scmp.ne.s32.totalorder %s248, %s249
      %p263 = scmp.eq.s32.totalorder %s37, 1
      %p264 = por %p262, %p263
      %p266 = scmp.ne.s32.totalorder %s249, %s265
      %p267 = scmp.eq.s32.totalorder %s37, 0
      %p268 = por %p266, %p267
      %s269 = ssub.s32 %s31, %s38
      %p270 = scmp.eq.s32.totalorder %s269, 0
      %s272 = sadd.s32 %s271, 1
      %s273 = scalar_select %p270, %s271, %s272
      %p276 = pneg %p270
      %p277 = scmp.eq.s32.totalorder %s31, 1
      %p278 = por %p276, %p277
      %p279 = scmp.ne.s32.totalorder %s271, %s274
      %p280 = scmp.eq.s32.totalorder %s31, 0
      %p281 = por %p279, %p280
      %p282 = scmp.ne.s32.totalorder %s271, %s274
      %p283 = scmp.eq.s32.totalorder %s36, 1
      %p284 = por %p282, %p283
      %p285 = scmp.ne.s32.totalorder %s274, %s275
      %p286 = scmp.eq.s32.totalorder %s36, 0
      %p287 = por %p285, %p286
      %p288 = scmp.ne.s32.totalorder %s274, %s275
      %p289 = scmp.eq.s32.totalorder %s37, 1
      %p290 = por %p288, %p289
      %p292 = scmp.ne.s32.totalorder %s275, %s291
      %p293 = scmp.eq.s32.totalorder %s37, 0
      %p294 = por %p292, %p293
      %s295 = ssub.s32 %s31, %s38
      %p296 = scmp.eq.s32.totalorder %s295, 0
      %s298 = sadd.s32 %s297, 1
      %s299 = scalar_select %p296, %s297, %s298
      %p302 = pneg %p296
      %p303 = scmp.eq.s32.totalorder %s31, 1
      %p304 = por %p302, %p303
      %p305 = scmp.ne.s32.totalorder %s297, %s300
      %p306 = scmp.eq.s32.totalorder %s31, 0
      %p307 = por %p305, %p306
      %p308 = scmp.ne.s32.totalorder %s297, %s300
      %p309 = scmp.eq.s32.totalorder %s36, 1
      %p310 = por %p308, %p309
      %p311 = scmp.ne.s32.totalorder %s300, %s301
      %p312 = scmp.eq.s32.totalorder %s36, 0
      %p313 = por %p311, %p312
      %p314 = scmp.ne.s32.totalorder %s300, %s301
      %p315 = scmp.eq.s32.totalorder %s37, 1
      %p316 = por %p314, %p315
      %p318 = scmp.ne.s32.totalorder %s301, %s317
      %p319 = scmp.eq.s32.totalorder %s37, 0
      %p320 = por %p318, %p319
      %p321 = scmp.le.s32.totalorder 1, %s31
      %p322 = scmp.lt.s32.totalorder %s31, 3
      %p323 = pnand %p321, %p322
      %p324 = pneg %p323
      // Predicated region
      $region9: #{tpu_custom_call.1} parent=5 // pred_check
        _
      $region10: #{tpu_custom_call.1} parent=5 // pred_check_branch
        %326 = sbr.rel (%p323) target = $region12
      $region11: #{tpu_custom_call.1} parent=5 // pred_region
        %s327 = ssub.s32 %s31, 1
        // Predicated region
        $region13: #{tpu_custom_call.1} parent=11 // pred_check
          %p328 = pneg %p78
        $region14: #{tpu_custom_call.1} parent=11 // pred_check_branch
          %330 = sbr.rel (%p328) target = $region16
        $region15: #{tpu_custom_call.1} parent=11 // pred_region
          _
        $region16: #{tpu_custom_call.1} parent=11 // pred_fallthru
          _
        // Predicated region
        $region17: #{tpu_custom_call.1} parent=11 // pred_check
          %p331 = pneg %p99
        $region18: #{tpu_custom_call.1} parent=11 // pred_check_branch
          %333 = sbr.rel (%p331) target = $region20
        $region19: #{tpu_custom_call.1} parent=11 // pred_region
          _
        $region20: #{tpu_custom_call.1} parent=11 // pred_fallthru
          _
        // Predicated region
        $region21: #{tpu_custom_call.1} parent=11 // pred_check
          %p334 = pneg %p120
        $region22: #{tpu_custom_call.1} parent=11 // pred_check_branch
          %336 = sbr.rel (%p334) target = $region24
        $region23: #{tpu_custom_call.1} parent=11 // pred_region
          %s338 = ssub.s32 1024, 1024
          %339 = vsyncadd [#allocation6], %s338
          %s340 = sshll.u32 [#allocation5], 4
          %s341 = int_to_ptr.vmem [resolvable:$true] %s340
          %346 = dma.hbm_to_vmem [thread:$0]  %s3, 1024, %s341, [#allocation6], 128, 128, 8
        $region24: #{tpu_custom_call.1} parent=11 // pred_fallthru
          _
        // Predicated region
        $region25: #{tpu_custom_call.1} parent=11 // pred_check
          %p347 = pneg %p141
        $region26: #{tpu_custom_call.1} parent=11 // pred_check_branch
          %349 = sbr.rel (%p347) target = $region28
        $region27: #{tpu_custom_call.1} parent=11 // pred_region
          _
        $region28: #{tpu_custom_call.1} parent=11 // pred_fallthru
          _
        // Predicated region
        $region29: #{tpu_custom_call.1} parent=11 // pred_check
          %p350 = pneg %p162
        $region30: #{tpu_custom_call.1} parent=11 // pred_check_branch
          %352 = sbr.rel (%p350) target = $region32
        $region31: #{tpu_custom_call.1} parent=11 // pred_region
          %s354 = ssub.s32 512, 512
          %355 = vsyncadd [#allocation6], %s354
          %s356 = sshll.u32 [#allocation7], 4
          %s357 = int_to_ptr.vmem [resolvable:$true] %s356
          %362 = dma.hbm_to_vmem [thread:$0]  %s5, 512, %s357, [#allocation6], 128, 128, 8
        $region32: #{tpu_custom_call.1} parent=11 // pred_fallthru
          _
        // Predicated region
        $region33: #{tpu_custom_call.1} parent=11 // pred_check
          %p363 = pneg %p183
        $region34: #{tpu_custom_call.1} parent=11 // pred_check_branch
          %365 = sbr.rel (%p363) target = $region36
        $region35: #{tpu_custom_call.1} parent=11 // pred_region
          _
        $region36: #{tpu_custom_call.1} parent=11 // pred_fallthru
          _
      $region12: #{tpu_custom_call.1} parent=5 // pred_fallthru
        _
      %p366 = scmp.lt.s32.totalorder %s31, 2
      // Predicated region
      $region37: #{tpu_custom_call.1} parent=5 // pred_check
        %p367 = pneg %p366
      $region38: #{tpu_custom_call.1} parent=5 // pred_check_branch
        %369 = sbr.rel (%p367) target = $region40
      $region39: #{tpu_custom_call.1} parent=5 // pred_region
        // Predicated region
        $region41: #{tpu_custom_call.1} parent=39 // pred_check
          %p370 = pneg %p51
        $region42: #{tpu_custom_call.1} parent=39 // pred_check_branch
          %372 = sbr.rel (%p370) target = $region44
        $region43: #{tpu_custom_call.1} parent=39 // pred_region
          %s373 = sand.u32 %s41, 1
          %s374 = scalar_lea.sflag [#allocation3], %s373
          %s375 = sand.u32 %s41, 1
          %s376 = smul.addr %s375, 8
          %s377 = scalar_lea.vmem [#allocation2], %s376
          %s379 = ssub.s32 128, 128
          %380 = vsyncadd %s374, %s379
          %s381 = smul.addr %s31, 128
          %s382 = scalar_lea.hbm %s0, %s381
          %s384 = sshll.u32 %s377, 4
          %s385 = int_to_ptr.vmem [resolvable:$true] %s384
          %387 = dma.hbm_to_vmem [thread:$0]  %s382, 128, %s385, %s374
        $region44: #{tpu_custom_call.1} parent=39 // pred_fallthru
          _
        // Predicated region
        $region45: #{tpu_custom_call.1} parent=39 // pred_check
          %p388 = pneg %p203
        $region46: #{tpu_custom_call.1} parent=39 // pred_check_branch
          %390 = sbr.rel (%p388) target = $region48
        $region47: #{tpu_custom_call.1} parent=39 // pred_region
          %s391 = sand.u32 %s193, 1
          %s392 = sand.u32 %s193, 1
          %s393 = smul.addr %s392, 24
          %s394 = scalar_lea.vmem [#allocation8], %s393
          %s395 = smul.addr %s31, 8
          %s396 = scalar_lea.vmem %s7, %s395
          // Predicated region
          $region49: #{tpu_custom_call.1} parent=47 // pred_check
            _
          $region50: #{tpu_custom_call.1} parent=47 // pred_check_branch
            %398 = sbr.rel (0) target = $region52
          $region51: #{tpu_custom_call.1} parent=47 // pred_region
            // Predicated region
            $region53: #{tpu_custom_call.1} parent=51 // pred_check
              _
            $region54: #{tpu_custom_call.1} parent=51 // pred_check_branch
              %400 = sbr.rel (0) target = $region56
            $region55: #{tpu_custom_call.1} parent=51 // pred_region
              // Predicated region
              $region68: #{tpu_custom_call.1} parent=55 // pred_check
                _
              $region69: #{tpu_custom_call.1} parent=55 // pred_check_branch
                %419 = sbr.rel (0) target = $region71
              $region70: #{tpu_custom_call.1} parent=55 // pred_region
                loop: start=0, step=1, limit=1
                $region72: #{tpu_custom_call.1} parent=70 // loop_pre_header
                  _
                $region73: #{tpu_custom_call.1} parent=70 // loop_header
                  %s421 = sphi 0, %s425
                  %p422 = scmp.ge.s32.totalorder %s421, 1
                  %s426 = sphi %s396, %s396
                  %s427 = sphi %s394, %s394
                $region74: #{tpu_custom_call.1} parent=70 // loop_header_branch
                  %424 = sbr.rel (%p422) target = $region78
                $region75: #{tpu_custom_call.1} parent=70 // loop_body
                  %v428 = vld [vmem:[%s426] sm:$0xff]
                  %429 = vst [vmem:[%s427] sm:$0xff] %v428
                  %v430 = vld [vmem:[%s426 + $0x10] sm:$0xff]
                  %431 = vst [vmem:[%s427 + $0x8] sm:$0xff] %v430
                  %v432 = vld [vmem:[%s426 + $0x20] sm:$0xff]
                  %433 = vst [vmem:[%s427 + $0x10] sm:$0xff] %v432
                $region76: #{tpu_custom_call.1} parent=70 // loop_footer
                  %s425 = sadd.s32 1, %s421
                $region77: #{tpu_custom_call.1} parent=70 // loop_footer_branch
                  %420 = sbr.rel target = $region73
                $region78: #{tpu_custom_call.1} parent=70 // loop_exit
                  _
              $region71: #{tpu_custom_call.1} parent=55 // pred_fallthru
                _
              // Predicated region
              $region79: #{tpu_custom_call.1} parent=55 // pred_check
                _
              $region80: #{tpu_custom_call.1} parent=55 // pred_check_branch
                %435 = sbr.rel target = $region82
              $region81: #{tpu_custom_call.1} parent=55 // pred_region
                _
              $region82: #{tpu_custom_call.1} parent=55 // pred_fallthru
                _
            $region56: #{tpu_custom_call.1} parent=51 // pred_fallthru
              _
            // Predicated region
            $region57: #{tpu_custom_call.1} parent=51 // pred_check
              _
            $region58: #{tpu_custom_call.1} parent=51 // pred_check_branch
              %402 = sbr.rel target = $region60
            $region59: #{tpu_custom_call.1} parent=51 // pred_region
              loop: start=0, step=1, limit=1
              $region61: #{tpu_custom_call.1} parent=59 // loop_pre_header
                _
              $region62: #{tpu_custom_call.1} parent=59 // loop_header
                %s405 = sphi 0, %s409
                %p406 = scmp.ge.s32.totalorder %s405, 1
                %s410 = sphi %s396, %s396
                %s411 = sphi %s394, %s394
              $region63: #{tpu_custom_call.1} parent=59 // loop_header_branch
                %408 = sbr.rel (%p406) target = $region67
              $region64: #{tpu_custom_call.1} parent=59 // loop_body
                %v412 = vld [vmem:[%s410] sm:$0xff]
                %413 = vst [vmem:[%s411] sm:$0xff] %v412
                %v414 = vld [vmem:[%s410 + $0x10] sm:$0xff]
                %415 = vst [vmem:[%s411 + $0x8] sm:$0xff] %v414
                %v416 = vld [vmem:[%s410 + $0x20] sm:$0xff]
                %417 = vst [vmem:[%s411 + $0x10] sm:$0xff] %v416
              $region65: #{tpu_custom_call.1} parent=59 // loop_footer
                %s409 = sadd.s32 1, %s405
              $region66: #{tpu_custom_call.1} parent=59 // loop_footer_branch
                %404 = sbr.rel target = $region62
              $region67: #{tpu_custom_call.1} parent=59 // loop_exit
                _
            $region60: #{tpu_custom_call.1} parent=51 // pred_fallthru
              _
          $region52: #{tpu_custom_call.1} parent=47 // pred_fallthru
            _
          %436 = vnop
        $region48: #{tpu_custom_call.1} parent=39 // pred_fallthru
          _
        // Predicated region
        $region83: #{tpu_custom_call.1} parent=39 // pred_check
          %p437 = pneg %p229
        $region84: #{tpu_custom_call.1} parent=39 // pred_check_branch
          %439 = sbr.rel (%p437) target = $region86
        $region85: #{tpu_custom_call.1} parent=39 // pred_region
          %s440 = sand.u32 %s219, 1
          %s441 = sand.u32 %s219, 1
          %s442 = smul.addr %s441, 80
          %s443 = scalar_lea.vmem [#allocation9], %s442
          %s444 = smul.addr %s31, 8
          %s445 = scalar_lea.vmem %s8, %s444
          // Predicated region
          $region87: #{tpu_custom_call.1} parent=85 // pred_check
            _
          $region88: #{tpu_custom_call.1} parent=85 // pred_check_branch
            %447 = sbr.rel (0) target = $region90
          $region89: #{tpu_custom_call.1} parent=85 // pred_region
            // Predicated region
            $region91: #{tpu_custom_call.1} parent=89 // pred_check
              _
            $region92: #{tpu_custom_call.1} parent=89 // pred_check_branch
              %449 = sbr.rel (0) target = $region94
            $region93: #{tpu_custom_call.1} parent=89 // pred_region
              // Predicated region
              $region106: #{tpu_custom_call.1} parent=93 // pred_check
                _
              $region107: #{tpu_custom_call.1} parent=93 // pred_check_branch
                %482 = sbr.rel (0) target = $region109
              $region108: #{tpu_custom_call.1} parent=93 // pred_region
                loop: start=0, step=1, limit=1
                $region110: #{tpu_custom_call.1} parent=108 // loop_pre_header
                  _
                $region111: #{tpu_custom_call.1} parent=108 // loop_header
                  %s484 = sphi 0, %s488
                  %p485 = scmp.ge.s32.totalorder %s484, 1
                  %s489 = sphi %s445, %s445
                  %s490 = sphi %s443, %s443
                $region112: #{tpu_custom_call.1} parent=108 // loop_header_branch
                  %487 = sbr.rel (%p485) target = $region116
                $region113: #{tpu_custom_call.1} parent=108 // loop_body
                  %v491 = vld [vmem:[%s489] sm:$0xff]
                  %492 = vst [vmem:[%s490] sm:$0xff] %v491
                  %v493 = vld [vmem:[%s489 + $0x10] sm:$0xff]
                  %494 = vst [vmem:[%s490 + $0x8] sm:$0xff] %v493
                  %v495 = vld [vmem:[%s489 + $0x20] sm:$0xff]
                  %496 = vst [vmem:[%s490 + $0x10] sm:$0xff] %v495
                  %v497 = vld [vmem:[%s489 + $0x30] sm:$0xff]
                  %498 = vst [vmem:[%s490 + $0x18] sm:$0xff] %v497
                  %v499 = vld [vmem:[%s489 + $0x40] sm:$0xff]
                  %500 = vst [vmem:[%s490 + $0x20] sm:$0xff] %v499
                  %v501 = vld [vmem:[%s489 + $0x50] sm:$0xff]
                  %502 = vst [vmem:[%s490 + $0x28] sm:$0xff] %v501
                  %v503 = vld [vmem:[%s489 + $0x60] sm:$0xff]
                  %504 = vst [vmem:[%s490 + $0x30] sm:$0xff] %v503
                  %v505 = vld [vmem:[%s489 + $0x70] sm:$0xff]
                  %506 = vst [vmem:[%s490 + $0x38] sm:$0xff] %v505
                  %v507 = vld [vmem:[%s489 + $0x80] sm:$0xff]
                  %508 = vst [vmem:[%s490 + $0x40] sm:$0xff] %v507
                  %v509 = vld [vmem:[%s489 + $0x90] sm:$0xff]
                  %510 = vst [vmem:[%s490 + $0x48] sm:$0xff] %v509
                $region114: #{tpu_custom_call.1} parent=108 // loop_footer
                  %s488 = sadd.s32 1, %s484
                $region115: #{tpu_custom_call.1} parent=108 // loop_footer_branch
                  %483 = sbr.rel target = $region111
                $region116: #{tpu_custom_call.1} parent=108 // loop_exit
                  _
              $region109: #{tpu_custom_call.1} parent=93 // pred_fallthru
                _
              // Predicated region
              $region117: #{tpu_custom_call.1} parent=93 // pred_check
                _
              $region118: #{tpu_custom_call.1} parent=93 // pred_check_branch
                %512 = sbr.rel target = $region120
              $region119: #{tpu_custom_call.1} parent=93 // pred_region
                _
              $region120: #{tpu_custom_call.1} parent=93 // pred_fallthru
                _
            $region94: #{tpu_custom_call.1} parent=89 // pred_fallthru
              _
            // Predicated region
            $region95: #{tpu_custom_call.1} parent=89 // pred_check
              _
            $region96: #{tpu_custom_call.1} parent=89 // pred_check_branch
              %451 = sbr.rel target = $region98
            $region97: #{tpu_custom_call.1} parent=89 // pred_region
              loop: start=0, step=1, limit=1
              $region99: #{tpu_custom_call.1} parent=97 // loop_pre_header
                _
              $region100: #{tpu_custom_call.1} parent=97 // loop_header
                %s454 = sphi 0, %s458
                %p455 = scmp.ge.s32.totalorder %s454, 1
                %s459 = sphi %s445, %s445
                %s460 = sphi %s443, %s443
              $region101: #{tpu_custom_call.1} parent=97 // loop_header_branch
                %457 = sbr.rel (%p455) target = $region105
              $region102: #{tpu_custom_call.1} parent=97 // loop_body
                %v461 = vld [vmem:[%s459] sm:$0xff]
                %462 = vst [vmem:[%s460] sm:$0xff] %v461
                %v463 = vld [vmem:[%s459 + $0x10] sm:$0xff]
                %464 = vst [vmem:[%s460 + $0x8] sm:$0xff] %v463
                %v465 = vld [vmem:[%s459 + $0x20] sm:$0xff]
                %466 = vst [vmem:[%s460 + $0x10] sm:$0xff] %v465
                %v467 = vld [vmem:[%s459 + $0x30] sm:$0xff]
                %468 = vst [vmem:[%s460 + $0x18] sm:$0xff] %v467
                %v469 = vld [vmem:[%s459 + $0x40] sm:$0xff]
                %470 = vst [vmem:[%s460 + $0x20] sm:$0xff] %v469
                %v471 = vld [vmem:[%s459 + $0x50] sm:$0xff]
                %472 = vst [vmem:[%s460 + $0x28] sm:$0xff] %v471
                %v473 = vld [vmem:[%s459 + $0x60] sm:$0xff]
                %474 = vst [vmem:[%s460 + $0x30] sm:$0xff] %v473
                %v475 = vld [vmem:[%s459 + $0x70] sm:$0xff]
                %476 = vst [vmem:[%s460 + $0x38] sm:$0xff] %v475
                %v477 = vld [vmem:[%s459 + $0x80] sm:$0xff]
                %478 = vst [vmem:[%s460 + $0x40] sm:$0xff] %v477
                %v479 = vld [vmem:[%s459 + $0x90] sm:$0xff]
                %480 = vst [vmem:[%s460 + $0x48] sm:$0xff] %v479
              $region103: #{tpu_custom_call.1} parent=97 // loop_footer
                %s458 = sadd.s32 1, %s454
              $region104: #{tpu_custom_call.1} parent=97 // loop_footer_branch
                %453 = sbr.rel target = $region100
              $region105: #{tpu_custom_call.1} parent=97 // loop_exit
                _
            $region98: #{tpu_custom_call.1} parent=89 // pred_fallthru
              _
          $region90: #{tpu_custom_call.1} parent=85 // pred_fallthru
            _
          %513 = vnop
        $region86: #{tpu_custom_call.1} parent=39 // pred_fallthru
          _
        // Predicated region
        $region121: #{tpu_custom_call.1} parent=39 // pred_check
          %p514 = pneg %p255
        $region122: #{tpu_custom_call.1} parent=39 // pred_check_branch
          %516 = sbr.rel (%p514) target = $region124
        $region123: #{tpu_custom_call.1} parent=39 // pred_region
          %s517 = sand.u32 %s245, 1
          %s518 = scalar_lea.sflag [#allocation11], %s517
          %s519 = sand.u32 %s245, 1
          %s520 = smul.addr %s519, 80
          %s521 = scalar_lea.vmem [#allocation10], %s520
          %s523 = ssub.s32 1280, 1280
          %524 = vsyncadd %s518, %s523
          %s525 = smul.addr %s31, 128
          %s526 = scalar_lea.hbm %s9, %s525
          %s527 = sshll.u32 %s521, 4
          %s528 = int_to_ptr.vmem [resolvable:$true] %s527
          %533 = dma.hbm_to_vmem [thread:$0]  %s526, 1280, %s528, %s518, 256, 128, 8
        $region124: #{tpu_custom_call.1} parent=39 // pred_fallthru
          _
      $region40: #{tpu_custom_call.1} parent=5 // pred_fallthru
        _
      %p534 = scmp.le.s32.totalorder 1, %s31
      %p535 = scmp.lt.s32.totalorder %s31, 3
      %p536 = pnand %p534, %p535
      %p537 = pneg %p536
      // Predicated region
      $region125: #{tpu_custom_call.1} parent=5 // pred_check
        _
      $region126: #{tpu_custom_call.1} parent=5 // pred_check_branch
        %539 = sbr.rel (%p536) target = $region128
      $region127: #{tpu_custom_call.1} parent=5 // pred_region
        %s540 = ssub.s32 %s31, 1
        %s541 = sand.u32 %s44, 1
        %s542 = scalar_lea.sflag [#allocation3], %s541
        %s543 = sand.u32 %s44, 1
        %s544 = smul.addr %s543, 8
        %s545 = scalar_lea.vmem [#allocation2], %s544
        // Predicated region
        $region129: #{tpu_custom_call.1} parent=127 // pred_check
          %p546 = pneg %p57
        $region130: #{tpu_custom_call.1} parent=127 // pred_check_branch
          %548 = sbr.rel (%p546) target = $region132
        $region131: #{tpu_custom_call.1} parent=127 // pred_region
          %549 = dma.done %s542, 128
        $region132: #{tpu_custom_call.1} parent=127 // pred_fallthru
          _
        // Predicated region
        $region133: #{tpu_custom_call.1} parent=127 // pred_check
          %p550 = pneg %p120
        $region134: #{tpu_custom_call.1} parent=127 // pred_check_branch
          %552 = sbr.rel (%p550) target = $region136
        $region135: #{tpu_custom_call.1} parent=127 // pred_region
          %553 = dma.done [#allocation6], 1024
        $region136: #{tpu_custom_call.1} parent=127 // pred_fallthru
          _
        // Predicated region
        $region137: #{tpu_custom_call.1} parent=127 // pred_check
          %p554 = pneg %p162
        $region138: #{tpu_custom_call.1} parent=127 // pred_check_branch
          %556 = sbr.rel (%p554) target = $region140
        $region139: #{tpu_custom_call.1} parent=127 // pred_region
          %557 = dma.done [#allocation6], 512
        $region140: #{tpu_custom_call.1} parent=127 // pred_fallthru
          _
        %s558 = sand.u32 %s196, 1
        %s559 = sand.u32 %s196, 1
        %s560 = smul.addr %s559, 24
        %s561 = scalar_lea.vmem [#allocation8], %s560
        // Predicated region
        $region141: #{tpu_custom_call.1} parent=127 // pred_check
          %p562 = pneg %p209
        $region142: #{tpu_custom_call.1} parent=127 // pred_check_branch
          %564 = sbr.rel (%p562) target = $region144
        $region143: #{tpu_custom_call.1} parent=127 // pred_region
          _
        $region144: #{tpu_custom_call.1} parent=127 // pred_fallthru
          _
        %s565 = sand.u32 %s222, 1
        %s566 = sand.u32 %s222, 1
        %s567 = smul.addr %s566, 80
        %s568 = scalar_lea.vmem [#allocation9], %s567
        // Predicated region
        $region145: #{tpu_custom_call.1} parent=127 // pred_check
          %p569 = pneg %p235
        $region146: #{tpu_custom_call.1} parent=127 // pred_check_branch
          %571 = sbr.rel (%p569) target = $region148
        $region147: #{tpu_custom_call.1} parent=127 // pred_region
          _
        $region148: #{tpu_custom_call.1} parent=127 // pred_fallthru
          _
        %s572 = sand.u32 %s248, 1
        %s573 = scalar_lea.sflag [#allocation11], %s572
        %s574 = sand.u32 %s248, 1
        %s575 = smul.addr %s574, 80
        %s576 = scalar_lea.vmem [#allocation10], %s575
        // Predicated region
        $region149: #{tpu_custom_call.1} parent=127 // pred_check
          %p577 = pneg %p261
        $region150: #{tpu_custom_call.1} parent=127 // pred_check_branch
          %579 = sbr.rel (%p577) target = $region152
        $region151: #{tpu_custom_call.1} parent=127 // pred_region
          %580 = dma.done %s573, 1280
        $region152: #{tpu_custom_call.1} parent=127 // pred_fallthru
          _
        %s581 = sand.u32 %s44, 1
        %s582 = scalar_lea.sflag [#allocation3], %s581
        %s583 = sand.u32 %s44, 1
        %s584 = smul.addr %s583, 8
        %s585 = scalar_lea.vmem [#allocation2], %s584
        %p586 = pneg %p57
        %p587 = pneg %p54
        %p588 = pneg %p78
        %p589 = pneg %p75
        %p590 = pneg %p99
        %p591 = pneg %p96
        %p592 = pneg %p120
        %p593 = pneg %p117
        %p594 = pneg %p141
        %p595 = pneg %p138
        %p596 = pneg %p162
        %p597 = pneg %p159
        %p598 = pneg %p183
        %p599 = pneg %p180
        %s600 = sand.u32 %s196, 1
        %s601 = sand.u32 %s196, 1
        %s602 = smul.addr %s601, 24
        %s603 = scalar_lea.vmem [#allocation8], %s602
        %p604 = pneg %p209
        %p605 = pneg %p206
        %s606 = sand.u32 %s222, 1
        %s607 = sand.u32 %s222, 1
        %s608 = smul.addr %s607, 80
        %s609 = scalar_lea.vmem [#allocation9], %s608
        %p610 = pneg %p235
        %p611 = pneg %p232
        %s612 = sand.u32 %s248, 1
        %s613 = scalar_lea.sflag [#allocation11], %s612
        %s614 = sand.u32 %s248, 1
        %s615 = smul.addr %s614, 80
        %s616 = scalar_lea.vmem [#allocation10], %s615
        %p617 = pneg %p261
        %p618 = pneg %p258
        %p619 = pneg %p287
        %p620 = pneg %p284
        %s621 = sand.u32 %s274, 1
        %s622 = scalar_lea.sflag [#allocation4], %s621
        %s623 = sand.u32 %s274, 1
        %s624 = smul.addr %s623, 8
        %s625 = scalar_lea.vmem [#allocation12], %s624
        %p626 = pneg %p313
        %p627 = pneg %p310
        %s628 = sand.u32 %s300, 1
        %s629 = scalar_lea.sflag [#allocation14], %s628
        %s630 = sand.u32 %s300, 1
        %s631 = smul.addr %s630, 8
        %s632 = scalar_lea.vmem [#allocation13], %s631
        %v634 = vld [vmem:[%s545] sm:$0xff]
        %v635 = vpack.c.bf16 %v634, %v634
        %v636 = vld [vmem:[%s1] sm:$0xff]
        %v637 = vld [vmem:[%s1 + $0x8] sm:$0xff]
        %v638 = vld [vmem:[%s1 + $0x10] sm:$0xff]
        %v639 = vld [vmem:[%s1 + $0x18] sm:$0xff]
        %v640 = vld [vmem:[%s1 + $0x20] sm:$0xff]
        %v641 = vld [vmem:[%s1 + $0x28] sm:$0xff]
        %v642 = vld [vmem:[%s1 + $0x30] sm:$0xff]
        %v643 = vld [vmem:[%s1 + $0x38] sm:$0xff]
        %v644 = vld [vmem:[%s1 + $0x40] sm:$0xff]
        %v645 = vld [vmem:[%s1 + $0x48] sm:$0xff]
        %v646 = vld [vmem:[%s1 + $0x50] sm:$0xff]
        %v647 = vld [vmem:[%s1 + $0x58] sm:$0xff]
        %v648 = vld [vmem:[%s1 + $0x60] sm:$0xff]
        %v649 = vld [vmem:[%s1 + $0x68] sm:$0xff]
        %v650 = vld [vmem:[%s1 + $0x70] sm:$0xff]
        %v651 = vld [vmem:[%s1 + $0x78] sm:$0xff]
        %v652 = vpack.c.bf16 %v637, %v636
        %v653 = vpack.c.bf16 %v639, %v638
        %v654 = vpack.c.bf16 %v641, %v640
        %v655 = vpack.c.bf16 %v643, %v642
        %v656 = vpack.c.bf16 %v645, %v644
        %v657 = vpack.c.bf16 %v647, %v646
        %v658 = vpack.c.bf16 %v649, %v648
        %v659 = vpack.c.bf16 %v651, %v650
        %v660 = vld [vmem:[%s2] sm:$0x1]
        %v662 = vlaneseq
        %v663 = vshrl.u32 %v662, 7
        %v664 = vsub.s32 0, %v663
        %v665 = vrot.slane %v660, %v664
        %667 = vmatprep.subr.bf16.mxu0 0
        %668 = vmatpush1.bf16.msra.mxu0 %v652
        %669 = vmatprep.subr.bf16.mxu0 0
        %670 = vmatpush1.bf16.msra.mxu0 %v653
        %671 = vmatprep.subr.bf16.mxu0 0
        %672 = vmatpush1.bf16.msra.mxu0 %v654
        %673 = vmatprep.subr.bf16.mxu0 0
        %674 = vmatpush1.bf16.msra.mxu0 %v655
        %675 = vmatprep.subr.bf16.mxu0 0
        %676 = vmatpush1.bf16.msra.mxu0 %v656
        %677 = vmatprep.subr.bf16.mxu0 0
        %678 = vmatpush1.bf16.msra.mxu0 %v657
        %679 = vmatprep.subr.bf16.mxu0 0
        %680 = vmatpush1.bf16.msra.mxu0 %v658
        %681 = vmatprep.subr.bf16.mxu0 0
        %682 = vmatpush1.bf16.msra.mxu0 %v659
        %683 = vmatprep.subr.bf16.mxu0 0
        %684 = vmatpush1.bf16.msra.mxu0 0
        %685 = vmatprep.subr.bf16.mxu0 0
        %686 = vmatpush1.bf16.msra.mxu0 0
        %687 = vmatprep.subr.bf16.mxu0 0
        %688 = vmatpush1.bf16.msra.mxu0 0
        %689 = vmatprep.subr.bf16.mxu0 0
        %690 = vmatpush1.bf16.msra.mxu0 0
        %691 = vmatprep.subr.bf16.mxu0 0
        %692 = vmatpush1.bf16.msra.mxu0 0
        %693 = vmatprep.subr.bf16.mxu0 0
        %694 = vmatpush1.bf16.msra.mxu0 0
        %695 = vmatprep.subr.bf16.mxu0 0
        %696 = vmatpush1.bf16.msra.mxu0 0
        %697 = vmatprep.subr.bf16.mxu0 0
        %698 = vmatpush1.bf16.msra.mxu0 0
        %699 = vmatprep.mubr.bf16.mxu0 0
        %700 = vmatmul.mubr.bf16.gmra.mrb[0].mxu0 %v635
        %v701 = vpop.f32.mrb[0].mxu0
        %v702 = vadd.f32 %v665, %v701
        %v703 = vpop.f32.mrb[0].mxu0
        %v704 = vpop.f32.mrb[0].mxu0
        %v705 = vpop.f32.mrb[0].mxu0
        %706 = vdwg.mxu0
        %v707 = vtanh.pop %v702
        %v708 = vpack.c.bf16 %v707, %v707
        %v709 = vld [vmem:[#allocation5] sm:$0xff]
        %v710 = vld [vmem:[#allocation5 + $0x8] sm:$0xff]
        %v711 = vld [vmem:[#allocation5 + $0x10] sm:$0xff]
        %v712 = vld [vmem:[#allocation5 + $0x18] sm:$0xff]
        %v713 = vld [vmem:[#allocation5 + $0x20] sm:$0xff]
        %v714 = vld [vmem:[#allocation5 + $0x28] sm:$0xff]
        %v715 = vld [vmem:[#allocation5 + $0x30] sm:$0xff]
        %v716 = vld [vmem:[#allocation5 + $0x38] sm:$0xff]
        %v717 = vpack.c.bf16 %v710, %v709
        %v718 = vpack.c.bf16 %v712, %v711
        %v719 = vpack.c.bf16 %v714, %v713
        %v720 = vpack.c.bf16 %v716, %v715
        %v721 = vld [vmem:[%s4] sm:$0x1]
        %v723 = vlaneseq
        %v724 = vshrl.u32 %v723, 7
        %v725 = vsub.s32 0, %v724
        %v726 = vrot.slane %v721, %v725
        %vm728 = vcmask 523264
        %v730 = vsel %vm728, %v708, 0
        %732 = vmatprep.subr.bf16.mxu0 0
        %733 = vmatpush1.bf16.msra.mxu0 %v717
        %734 = vmatprep.subr.bf16.mxu0 0
        %735 = vmatpush1.bf16.msra.mxu0 %v718
        %736 = vmatprep.subr.bf16.mxu0 0
        %737 = vmatpush1.bf16.msra.mxu0 %v719
        %738 = vmatprep.subr.bf16.mxu0 0
        %739 = vmatpush1.bf16.msra.mxu0 %v720
        %740 = vmatprep.subr.bf16.mxu0 0
        %741 = vmatpush1.bf16.msra.mxu0 0
        %742 = vmatprep.subr.bf16.mxu0 0
        %743 = vmatpush1.bf16.msra.mxu0 0
        %744 = vmatprep.subr.bf16.mxu0 0
        %745 = vmatpush1.bf16.msra.mxu0 0
        %746 = vmatprep.subr.bf16.mxu0 0
        %747 = vmatpush1.bf16.msra.mxu0 0
        %748 = vmatprep.subr.bf16.mxu0 0
        %749 = vmatpush1.bf16.msra.mxu0 0
        %750 = vmatprep.subr.bf16.mxu0 0
        %751 = vmatpush1.bf16.msra.mxu0 0
        %752 = vmatprep.subr.bf16.mxu0 0
        %753 = vmatpush1.bf16.msra.mxu0 0
        %754 = vmatprep.subr.bf16.mxu0 0
        %755 = vmatpush1.bf16.msra.mxu0 0
        %756 = vmatprep.subr.bf16.mxu0 0
        %757 = vmatpush1.bf16.msra.mxu0 0
        %758 = vmatprep.subr.bf16.mxu0 0
        %759 = vmatpush1.bf16.msra.mxu0 0
        %760 = vmatprep.subr.bf16.mxu0 0
        %761 = vmatpush1.bf16.msra.mxu0 0
        %762 = vmatprep.subr.bf16.mxu0 0
        %763 = vmatpush1.bf16.msra.mxu0 0
        %764 = vmatprep.mubr.bf16.mxu0 0
        %765 = vmatmul.mubr.bf16.gmra.mrb[0].mxu0 %v730
        %v766 = vpop.f32.mrb[0].mxu0
        %v767 = vadd.f32 %v726, %v766
        %v768 = vpop.f32.mrb[0].mxu0
        %v769 = vpop.f32.mrb[0].mxu0
        %v770 = vpop.f32.mrb[0].mxu0
        %771 = vdwg.mxu0
        %v772 = vmax.f32 %v767, 0.0
        %v773 = vand.u32 2147483647, %v767
        %v774 = vsub.f32 0.0, %v773
        %v775 = vmul.f32 %v774, 1.442695
        %v776 = vpow.pop %v775
        %v777 = vadd.f32 %v776, 1.0
        %v778 = vlog2.pop %v777
        %v779 = vmul.f32 %v778, 0.6931472
        %v780 = vadd.f32 %v772, %v779
        %v781 = vld [vmem:[%s561] sm:$0xff]
        %v782 = vld [vmem:[%s568] sm:$0xff]
        %v783 = vld [vmem:[%s568 + $0x8] sm:$0xff]
        %v784 = vld [vmem:[%s568 + $0x10] sm:$0xff]
        %v785 = vld [vmem:[%s568 + $0x18] sm:$0xff]
        %v786 = vld [vmem:[%s568 + $0x20] sm:$0xff]
        %v787 = vld [vmem:[%s568 + $0x28] sm:$0xff]
        %v788 = vld [vmem:[%s568 + $0x30] sm:$0xff]
        %v789 = vld [vmem:[%s568 + $0x38] sm:$0xff]
        %v790 = vld [vmem:[%s568 + $0x40] sm:$0xff]
        %v791 = vld [vmem:[%s568 + $0x48] sm:$0xff]
        %v792 = vadd.f32 %v780, 10.0
        %v793 = vsub.f32 %v792, 0.33333334
        %v794 = vmul.f32 %v792, 9.0
        %v795 = vsub.f32 %v794, 3.0
        %v796 = vrsqrt.pop %v795
        %v797 = vmul.f32 %v795, %v796
        %vm798 = vcmp.eq.f32.partialorder %v795, inf
        %v799 = vsel %vm798, %v795, %v797
        %vm800 = vcmp.eq.f32.partialorder %v795, 0.0
        %v801 = vand.u32 %v795, 2147483648
        %v802 = vsel %vm800, %v801, %v799
        %v803 = vrcp.pop %v802
        %v804 = vmul.f32 %v781, %v803
        %v805 = vadd.f32 %v804, 1.0
        %v806 = vmul.f32 %v793, %v805
        %v807 = vmul.f32 %v806, %v805
        %v808 = vmul.f32 %v807, %v805
        %v809 = vmax.f32 %v808, 1e-06
        %v810 = vadd.f32 %v780, 1e-12
        %v811 = vrcp.pop %v810
        %v812 = vmul.f32 %v782, %v811
        %v813 = vadd.f32 %v812, 0.0
        %v814 = vadd.f32 %v780, 1.0
        %v815 = vrcp.pop %v814
        %v816 = vmul.f32 %v783, %v815
        %v817 = vadd.f32 %v813, %v816
        %v818 = vadd.f32 %v780, 2.0
        %v819 = vrcp.pop %v818
        %v820 = vmul.f32 %v784, %v819
        %v821 = vadd.f32 %v817, %v820
        %v822 = vadd.f32 %v780, 3.0
        %v823 = vrcp.pop %v822
        %v824 = vmul.f32 %v785, %v823
        %v825 = vadd.f32 %v821, %v824
        %v826 = vadd.f32 %v780, 4.0
        %v827 = vrcp.pop %v826
        %v828 = vmul.f32 %v786, %v827
        %v829 = vadd.f32 %v825, %v828
        %v830 = vadd.f32 %v780, 5.0
        %v831 = vrcp.pop %v830
        %v832 = vmul.f32 %v787, %v831
        %v833 = vadd.f32 %v829, %v832
        %v834 = vadd.f32 %v780, 6.0
        %v835 = vrcp.pop %v834
        %v836 = vmul.f32 %v788, %v835
        %v837 = vadd.f32 %v833, %v836
        %v838 = vadd.f32 %v780, 7.0
        %v839 = vrcp.pop %v838
        %v840 = vmul.f32 %v789, %v839
        %v841 = vadd.f32 %v837, %v840
        %v842 = vadd.f32 %v780, 8.0
        %v843 = vrcp.pop %v842
        %v844 = vmul.f32 %v790, %v843
        %v845 = vadd.f32 %v841, %v844
        %v846 = vadd.f32 %v780, 9.0
        %v847 = vrcp.pop %v846
        %v848 = vmul.f32 %v791, %v847
        %v849 = vadd.f32 %v845, %v848
        %v850 = vmul.f32 %v849, 1.442695
        %v851 = vpow.pop %v850
        %v852 = vmul.f32 %v809, %v851
        %854 = vrot.lane.b32.xlu0 %v780, 96
        %v855 = vpop.permute.xlu0 %854
        %v857 = vmul.f32 %v852, %v855
        %s858 = scalar_lea.vmem %s561, 8 [#allocation8]
        %v859 = vld [vmem:[%s858] sm:$0xff]
        %v860 = vld [vmem:[%s576] sm:$0xff]
        %v861 = vld [vmem:[%s576 + $0x8] sm:$0xff]
        %v862 = vld [vmem:[%s576 + $0x10] sm:$0xff]
        %v863 = vld [vmem:[%s576 + $0x18] sm:$0xff]
        %v864 = vld [vmem:[%s576 + $0x20] sm:$0xff]
        %v865 = vld [vmem:[%s576 + $0x28] sm:$0xff]
        %v866 = vld [vmem:[%s576 + $0x30] sm:$0xff]
        %v867 = vld [vmem:[%s576 + $0x38] sm:$0xff]
        %v868 = vld [vmem:[%s576 + $0x40] sm:$0xff]
        %v869 = vld [vmem:[%s576 + $0x48] sm:$0xff]
        %v870 = vadd.f32 %v857, 10.0
        %v871 = vsub.f32 %v870, 0.33333334
        %v872 = vmul.f32 %v870, 9.0
        %v873 = vsub.f32 %v872, 3.0
        %v874 = vrsqrt.pop %v873
        %v875 = vmul.f32 %v873, %v874
        %vm876 = vcmp.eq.f32.partialorder %v873, inf
        %v877 = vsel %vm876, %v873, %v875
        %vm878 = vcmp.eq.f32.partialorder %v873, 0.0
        %v879 = vand.u32 %v873, 2147483648
        %v880 = vsel %vm878, %v879, %v877
        %v881 = vrcp.pop %v880
        %v882 = vmul.f32 %v859, %v881
        %v883 = vadd.f32 %v882, 1.0
        %v884 = vmul.f32 %v871, %v883
        %v885 = vmul.f32 %v884, %v883
        %v886 = vmul.f32 %v885, %v883
        %v887 = vmax.f32 %v886, 1e-06
        %v888 = vadd.f32 %v857, 1e-12
        %v889 = vrcp.pop %v888
        %v890 = vmul.f32 %v860, %v889
        %v891 = vadd.f32 %v890, 0.0
        %v892 = vadd.f32 %v857, 1.0
        %v893 = vrcp.pop %v892
        %v894 = vmul.f32 %v861, %v893
        %v895 = vadd.f32 %v891, %v894
        %v896 = vadd.f32 %v857, 2.0
        %v897 = vrcp.pop %v896
        %v898 = vmul.f32 %v862, %v897
        %v899 = vadd.f32 %v895, %v898
        %v900 = vadd.f32 %v857, 3.0
        %v901 = vrcp.pop %v900
        %v902 = vmul.f32 %v863, %v901
        %v903 = vadd.f32 %v899, %v902
        %v904 = vadd.f32 %v857, 4.0
        %v905 = vrcp.pop %v904
        %v906 = vmul.f32 %v864, %v905
        %v907 = vadd.f32 %v903, %v906
        %v908 = vadd.f32 %v857, 5.0
        %v909 = vrcp.pop %v908
        %v910 = vmul.f32 %v865, %v909
        %v911 = vadd.f32 %v907, %v910
        %v912 = vadd.f32 %v857, 6.0
        %v913 = vrcp.pop %v912
        %v914 = vmul.f32 %v866, %v913
        %v915 = vadd.f32 %v911, %v914
        %v916 = vadd.f32 %v857, 7.0
        %v917 = vrcp.pop %v916
        %v918 = vmul.f32 %v867, %v917
        %v919 = vadd.f32 %v915, %v918
        %v920 = vadd.f32 %v857, 8.0
        %v921 = vrcp.pop %v920
        %v922 = vmul.f32 %v868, %v921
        %v923 = vadd.f32 %v919, %v922
        %v924 = vadd.f32 %v857, 9.0
        %v925 = vrcp.pop %v924
        %v926 = vmul.f32 %v869, %v925
        %v927 = vadd.f32 %v923, %v926
        %v928 = vmul.f32 %v927, 1.442695
        %v929 = vpow.pop %v928
        %v930 = vmul.f32 %v887, %v929
        %931 = vset.pattern.permute.xlu0 64
        %932 = vperm.xlu0 %931, %v780
        %v933 = vpop.permute.xlu0 %932
        %v935 = vmul.f32 %v930, %v933
        %s936 = scalar_lea.vmem %s561, 16 [#allocation8]
        %v937 = vld [vmem:[%s936] sm:$0xff]
        %v938 = vmax.f32 %v935, 0.0
        %v939 = vadd.f32 %v938, 1e-12
        %v940 = vrsqrt.pop %v939
        %v941 = vmul.f32 %v939, %v940
        %vm942 = vcmp.eq.f32.partialorder %v939, inf
        %v943 = vsel %vm942, %v939, %v941
        %vm944 = vcmp.eq.f32.partialorder %v939, 0.0
        %v945 = vand.u32 %v939, 2147483648
        %v946 = vsel %vm944, %v945, %v943
        %v947 = vmul.f32 %v946, %v937
        %v948 = vadd.f32 %v938, %v947
        %v949 = vadd.f32 %v948, 0.5
        %v950 = vfloor.f32 %v949
        %v951 = vmax.f32 %v950, 0.0
        %v952 = vadd.f32 %v951, %v857
        %v953 = vsub.f32 0.0, %v952
        %v954 = vmul.f32 %v953, 1.442695
        %v955 = vpow.pop %v954
        %v956 = vadd.f32 %v955, 1.0
        %v957 = vrcp.pop %v956
        %v958 = vmul.f32 1.0, %v957
        %v959 = vpack.c.bf16 %v958, %v958
        %v960 = vld [vmem:[#allocation7] sm:$0xff]
        %v961 = vld [vmem:[#allocation7 + $0x8] sm:$0xff]
        %v962 = vld [vmem:[#allocation7 + $0x10] sm:$0xff]
        %v963 = vld [vmem:[#allocation7 + $0x18] sm:$0xff]
        %v964 = vpack.c.bf16 %v961, %v960
        %v965 = vpack.c.bf16 %v963, %v962
        %v966 = vld [vmem:[%s6] sm:$0x1]
        %v968 = vlaneseq
        %v969 = vshrl.u32 %v968, 7
        %v970 = vsub.s32 0, %v969
        %v971 = vrot.slane %v966, %v970
        %vm973 = vcmask 261120
        %v975 = vsel %vm973, %v959, 0
        %977 = vmatprep.subr.bf16.mxu0 0
        %978 = vmatpush1.bf16.msra.mxu0 %v964
        %979 = vmatprep.subr.bf16.mxu0 0
        %980 = vmatpush1.bf16.msra.mxu0 %v965
        %981 = vmatprep.subr.bf16.mxu0 0
        %982 = vmatpush1.bf16.msra.mxu0 0
        %983 = vmatprep.subr.bf16.mxu0 0
        %984 = vmatpush1.bf16.msra.mxu0 0
        %985 = vmatprep.subr.bf16.mxu0 0
        %986 = vmatpush1.bf16.msra.mxu0 0
        %987 = vmatprep.subr.bf16.mxu0 0
        %988 = vmatpush1.bf16.msra.mxu0 0
        %989 = vmatprep.subr.bf16.mxu0 0
        %990 = vmatpush1.bf16.msra.mxu0 0
        %991 = vmatprep.subr.bf16.mxu0 0
        %992 = vmatpush1.bf16.msra.mxu0 0
        %993 = vmatprep.subr.bf16.mxu0 0
        %994 = vmatpush1.bf16.msra.mxu0 0
        %995 = vmatprep.subr.bf16.mxu0 0
        %996 = vmatpush1.bf16.msra.mxu0 0
        %997 = vmatprep.subr.bf16.mxu0 0
        %998 = vmatpush1.bf16.msra.mxu0 0
        %999 = vmatprep.subr.bf16.mxu0 0
        %1000 = vmatpush1.bf16.msra.mxu0 0
        %1001 = vmatprep.subr.bf16.mxu0 0
        %1002 = vmatpush1.bf16.msra.mxu0 0
        %1003 = vmatprep.subr.bf16.mxu0 0
        %1004 = vmatpush1.bf16.msra.mxu0 0
        %1005 = vmatprep.subr.bf16.mxu0 0
        %1006 = vmatpush1.bf16.msra.mxu0 0
        %1007 = vmatprep.subr.bf16.mxu0 0
        %1008 = vmatpush1.bf16.msra.mxu0 0
        %1009 = vmatprep.mubr.bf16.mxu0 0
        %1010 = vmatmul.mubr.bf16.gmra.mrb[0].mxu0 %v975
        %v1011 = vpop.f32.mrb[0].mxu0
        %v1012 = vadd.f32 %v971, %v1011
        %v1013 = vpop.f32.mrb[0].mxu0
        %v1014 = vpop.f32.mrb[0].mxu0
        %v1015 = vpop.f32.mrb[0].mxu0
        %1016 = vdwg.mxu0
        %1018 = vrot.lane.b32.xlu0 %v935, 64
        %v1019 = vpop.permute.xlu0 %1018
        %v1021 = vsel %vm728, %v780, %v1019
        %vm1022 = vcmask 785408
        %v1023 = vsel %vm1022, %v1021, 0.0
        %1024 = vst [vmem:[%s625] sm:$0xff] %v1023
        %1025 = vst [vmem:[%s632] sm:$0xff] %v1012
        %s1026 = sand.u32 %s274, 1
        %s1027 = scalar_lea.sflag [#allocation4], %s1026
        %s1028 = sand.u32 %s274, 1
        %s1029 = smul.addr %s1028, 8
        %s1030 = scalar_lea.vmem [#allocation12], %s1029
        %s1031 = sand.u32 %s300, 1
        %s1032 = scalar_lea.sflag [#allocation14], %s1031
        %s1033 = sand.u32 %s300, 1
        %s1034 = smul.addr %s1033, 8
        %s1035 = scalar_lea.vmem [#allocation13], %s1034
        // Predicated region
        $region153: #{tpu_custom_call.1} parent=127 // pred_check
          %p1036 = pneg %p284
        $region154: #{tpu_custom_call.1} parent=127 // pred_check_branch
          %1038 = sbr.rel (%p1036) target = $region156
        $region155: #{tpu_custom_call.1} parent=127 // pred_region
          %s1040 = ssub.s32 128, 128
          %1041 = vsyncadd %s1027, %s1040
          %s1042 = smul.addr %s36, 128
          %s1043 = scalar_lea.hbm %s10, %s1042
          %s1045 = sshll.u32 %s1030, 4
          %s1046 = int_to_ptr.vmem [resolvable:$true] %s1045
          %1048 = dma.vmem_to_hbm [thread:$0]  %s1046, 128, %s1043, %s1027
        $region156: #{tpu_custom_call.1} parent=127 // pred_fallthru
          _
        // Predicated region
        $region157: #{tpu_custom_call.1} parent=127 // pred_check
          %p1049 = pneg %p310
        $region158: #{tpu_custom_call.1} parent=127 // pred_check_branch
          %1051 = sbr.rel (%p1049) target = $region160
        $region159: #{tpu_custom_call.1} parent=127 // pred_region
          %s1053 = ssub.s32 128, 128
          %1054 = vsyncadd %s1032, %s1053
          %s1055 = smul.addr %s36, 128
          %s1056 = scalar_lea.hbm %s11, %s1055
          %s1058 = sshll.u32 %s1035, 4
          %s1059 = int_to_ptr.vmem [resolvable:$true] %s1058
          %1061 = dma.vmem_to_hbm [thread:$0]  %s1059, 128, %s1056, %s1032
        $region160: #{tpu_custom_call.1} parent=127 // pred_fallthru
          _
      $region128: #{tpu_custom_call.1} parent=5 // pred_fallthru
        _
      %p1062 = scmp.le.s32.totalorder 2, %s31
      // Predicated region
      $region161: #{tpu_custom_call.1} parent=5 // pred_check
        %p1063 = pneg %p1062
      $region162: #{tpu_custom_call.1} parent=5 // pred_check_branch
        %1065 = sbr.rel (%p1063) target = $region164
      $region163: #{tpu_custom_call.1} parent=5 // pred_region
        %s1066 = ssub.s32 %s31, 2
        // Predicated region
        $region165: #{tpu_custom_call.1} parent=163 // pred_check
          %p1067 = pneg %p290
        $region166: #{tpu_custom_call.1} parent=163 // pred_check_branch
          %1069 = sbr.rel (%p1067) target = $region168
        $region167: #{tpu_custom_call.1} parent=163 // pred_region
          %s1070 = sand.u32 %s275, 1
          %s1071 = scalar_lea.sflag [#allocation4], %s1070
          %s1072 = sand.u32 %s275, 1
          %s1073 = smul.addr %s1072, 8
          %s1074 = scalar_lea.vmem [#allocation12], %s1073
          %1075 = dma.done %s1071, 128
        $region168: #{tpu_custom_call.1} parent=163 // pred_fallthru
          _
        // Predicated region
        $region169: #{tpu_custom_call.1} parent=163 // pred_check
          %p1076 = pneg %p316
        $region170: #{tpu_custom_call.1} parent=163 // pred_check_branch
          %1078 = sbr.rel (%p1076) target = $region172
        $region171: #{tpu_custom_call.1} parent=163 // pred_region
          %s1079 = sand.u32 %s301, 1
          %s1080 = scalar_lea.sflag [#allocation14], %s1079
          %s1081 = sand.u32 %s301, 1
          %s1082 = smul.addr %s1081, 8
          %s1083 = scalar_lea.vmem [#allocation13], %s1082
          %1084 = dma.done %s1080, 128
        $region172: #{tpu_custom_call.1} parent=163 // pred_fallthru
          _
      $region164: #{tpu_custom_call.1} parent=5 // pred_fallthru
        _
    $region6: #{tpu_custom_call.1} parent=1 // loop_footer
      %s35 = sadd.s32 1, %s31
    $region7: #{tpu_custom_call.1} parent=1 // loop_footer_branch
      %30 = sbr.rel target = $region3
    $region8: #{tpu_custom_call.1} parent=1 // loop_exit
      _
    %1085 = vsyncpa [#allocation3], 1
    %s1086 = scalar_lea.sflag [#allocation3], 1
    %1087 = vsyncpa %s1086, 1
    %1088 = vsyncpa [#allocation6], 1
    %1089 = vsyncpa [#allocation11], 1
    %s1090 = scalar_lea.sflag [#allocation11], 1
    %1091 = vsyncpa %s1090, 1
    %1092 = vsyncpa [#allocation4], 1
    %s1093 = scalar_lea.sflag [#allocation4], 1
    %1094 = vsyncpa %s1093, 1
    %1095 = vsyncpa [#allocation14], 1
    %s1096 = scalar_lea.sflag [#allocation14], 1
    %1097 = vsyncpa %s1096, 1

</llo_original>
